<compile_context>
chip_gen: v6e
topology: v6e:2x2x1
jax: 0.10.0
libtpu: 0.0.40
codegen_flags: <defaults>
</compile_context>

<pallas_src>
import jax
import jax.numpy as jnp
from jax import lax
from jax.experimental import pallas as pl
from jax.experimental.pallas import tpu as pltpu

HP = 128  # per-gate lane slab: hidden_size (50) padded to one vreg lane width


def lstm_fc_kernel(x_ref, wih_ref, b_ref, whh_ref, fcw_ref, fcb_ref, out_ref):
    # x_ref  : (T, Bt, 1)   raw inputs (input_size == 1), batch padded to sublane tile
    # wih_ref: (1, 4*HP)    input->gate row, gate slabs ordered (i, f, o, g)
    # b_ref  : (1, 4*HP)    b_ih + b_hh, same slab layout
    # whh_ref: (HP, 4*HP)   recurrent weights, zero-padded rows/cols, same slab layout
    # fcw_ref: (HP, FP)     final Linear weight (zero-padded)
    # fcb_ref: (1, FP)      final Linear bias (zero-padded)
    # out_ref: (Bt, FP)
    T, Bt, _ = x_ref.shape

    # Hoist + pre-broadcast the small loop-invariant operands (a handful of vregs).
    wih_b = jnp.broadcast_to(wih_ref[...], (Bt, 4 * HP))
    bias_b = jnp.broadcast_to(b_ref[...], (Bt, 4 * HP))

    def step(t, carry):
        h, c = carry
        x_t = x_ref[t]                                     # (Bt, 1)
        # Input projection (I == 1): one VPU broadcast-multiply, off the MXU path.
        # Recurrent part: single fused MXU push per step; whh streamed from VMEM.
        gates = x_t * wih_b + bias_b + jnp.dot(
            h, whh_ref[...], preferred_element_type=jnp.float32)      # (Bt, 4*HP)
        # 128-aligned slabs -> every slice below is a whole-vreg view.
        sig = jax.nn.sigmoid(gates[:, : 3 * HP])           # i, f, o in one EUP pass
        g = jnp.tanh(gates[:, 3 * HP:])                    # cell candidate
        i_g = sig[:, :HP]
        f_g = sig[:, HP: 2 * HP]
        o_g = sig[:, 2 * HP: 3 * HP]
        c_new = f_g * c + i_g * g
        h_new = o_g * jnp.tanh(c_new)
        return (h_new, c_new)

    h0 = jnp.zeros((Bt, HP), jnp.float32)
    c0 = jnp.zeros((Bt, HP), jnp.float32)
    # Bounded unroll: keeps LLO scheduling visibility without spilling at large T.
    h_last, _ = lax.fori_loop(0, T, step, (h0, c0), unroll=min(T, 8))

    # TODO(synk): nn.Dropout is identity in eval/inference mode; not applied here.
    out_ref[...] = (jnp.dot(h_last, fcw_ref[...], preferred_element_type=jnp.float32)
                    + fcb_ref[...])


def _round_up(n, m):
    return ((n + m - 1) // m) * m


def _pad2(a, rows, cols):
    r, c = a.shape
    return jnp.pad(a, ((0, rows - r), (0, cols - c)))


def init_params(key, input_size=1, hidden_size=50, forecast_len=24):
    """PyTorch-style uniform(-1/sqrt(H), 1/sqrt(H)) init, PyTorch gate order (i, f, g, o)."""
    k = 1.0 / float(hidden_size) ** 0.5
    keys = jax.random.split(key, 6)
    w_ih = jax.random.uniform(keys[0], (4, input_size, hidden_size), jnp.float32, -k, k)
    w_hh = jax.random.uniform(keys[1], (4, hidden_size, hidden_size), jnp.float32, -k, k)
    b_ih = jax.random.uniform(keys[2], (4, 1, hidden_size), jnp.float32, -k, k)
    b_hh = jax.random.uniform(keys[3], (4, 1, hidden_size), jnp.float32, -k, k)
    fc_w = jax.random.uniform(keys[4], (hidden_size, forecast_len), jnp.float32, -k, k)
    fc_b = jax.random.uniform(keys[5], (1, forecast_len), jnp.float32, -k, k)
    return {"w_ih": w_ih, "w_hh": w_hh, "b": b_ih + b_hh, "fc_w": fc_w, "fc_b": fc_b}


def price_lstm_forward(x, params, *, batch_tile=8):
    """x: (B, T, 1) batch-first, as in the PyTorch module. Returns (B, forecast_len)."""
    B, T, I = x.shape
    assert I == 1, "PriceLSTM uses input_size=1"
    assert batch_tile % 8 == 0
    H = params["w_hh"].shape[-1]
    F = params["fc_w"].shape[-1]
    assert H <= HP

    FP = _round_up(max(F, 128), 128)               # lane-dense output store
    BP = _round_up(max(B, batch_tile), batch_tile)  # sublane-tile-padded batch

    # Fused gate layout (i, f, o, g) from PyTorch order (i, f, g, o); each gate gets a
    # zero-padded 128-lane slab so in-kernel slices are vreg-aligned.
    order = (0, 1, 3, 2)
    wih = jnp.concatenate([_pad2(params["w_ih"][k], 1, HP) for k in order], axis=-1)   # (1, 4HP)
    whh = jnp.concatenate([_pad2(params["w_hh"][k], HP, HP) for k in order], axis=-1)  # (HP, 4HP)
    bias = jnp.concatenate([_pad2(params["b"][k], 1, HP) for k in order], axis=-1)     # (1, 4HP)
    fcw = _pad2(params["fc_w"], HP, FP)                                                # (HP, FP)
    fcb = _pad2(params["fc_b"], 1, FP)                                                 # (1, FP)

    # Time-major raw input (no xw materialization); padded batch rows are zeros.
    x_tm = jnp.transpose(x, (1, 0, 2)).astype(jnp.float32)      # (T, B, 1)
    x_tm = jnp.pad(x_tm, ((0, 0), (0, BP - B), (0, 0)))         # (T, BP, 1)

    grid = (BP // batch_tile,)
    out = pl.pallas_call(
        lstm_fc_kernel,
        out_shape=jax.ShapeDtypeStruct((BP, FP), jnp.float32),
        grid=grid,
        in_specs=[
            pl.BlockSpec((T, batch_tile, 1), lambda b: (0, b, 0)),
            pl.BlockSpec((1, 4 * HP), lambda b: (0, 0)),
            pl.BlockSpec((1, 4 * HP), lambda b: (0, 0)),
            pl.BlockSpec((HP, 4 * HP), lambda b: (0, 0)),
            pl.BlockSpec((HP, FP), lambda b: (0, 0)),
            pl.BlockSpec((1, FP), lambda b: (0, 0)),
        ],
        out_specs=pl.BlockSpec((batch_tile, FP), lambda b: (b, 0)),
        compiler_params=pltpu.CompilerParams(
            dimension_semantics=("parallel",)),  # batch tiles split across TCs on v7x
    )(x_tm, wih, bias, whh, fcw, fcb)
    return out[:B, :F]


def price_lstm_reference(x, params):
    """Pure-JAX reference of the same forward pass (for a sanity check)."""
    B, T, I = x.shape
    H = params["w_hh"].shape[-1]
    h0 = jnp.zeros((B, H), jnp.float32)
    c0 = jnp.zeros((B, H), jnp.float32)

    def step(carry, x_t):
        h, c = carry

        def gate(k):
            return x_t @ params["w_ih"][k] + h @ params["w_hh"][k] + params["b"][k]

        i_g = jax.nn.sigmoid(gate(0))
        f_g = jax.nn.sigmoid(gate(1))
        g_g = jnp.tanh(gate(2))
        o_g = jax.nn.sigmoid(gate(3))
        c_new = f_g * c + i_g * g_g
        h_new = o_g * jnp.tanh(c_new)
        return (h_new, c_new), None

    (h_last, _), _ = lax.scan(step, (h0, c0), jnp.transpose(x, (1, 0, 2)))
    return h_last @ params["fc_w"] + params["fc_b"]


if __name__ == "__main__":
    B, T = 2, 8
    input_size, hidden_size, forecast_len = 1, 50, 24

    key = jax.random.PRNGKey(0)
    k_x, k_p = jax.random.split(key)
    x = jax.random.normal(k_x, (B, T, input_size), jnp.float32)
    params = init_params(k_p, input_size, hidden_size, forecast_len)

    out = price_lstm_forward(x, params)
    out = jax.block_until_ready(out)

    ref = jax.block_until_ready(price_lstm_reference(x, params))
    assert out.shape == (B, forecast_len)
    assert jnp.allclose(out, ref, atol=1e-4, rtol=1e-4), "mismatch vs JAX reference"

    print("KERNEL_OK")
</pallas_src>

<mosaic_0001>
module attributes {stable_mosaic.version = 11 : i64} {
  func.func @lstm_fc_kernel(%arg0: i32, %arg1: memref<8x8x1xf32, #tpu.memory_space<vmem>>, %arg2: memref<1x512xf32, #tpu.memory_space<vmem>>, %arg3: memref<1x512xf32, #tpu.memory_space<vmem>>, %arg4: memref<128x512xf32, #tpu.memory_space<vmem>>, %arg5: memref<128x128xf32, #tpu.memory_space<vmem>>, %arg6: memref<1x128xf32, #tpu.memory_space<vmem>>, %arg7: memref<8x128xf32, #tpu.memory_space<vmem>>) attributes {dimension_semantics = [#tpu.dimension_semantics<parallel>], iteration_bounds = array<i64: 1>, scalar_prefetch = 0 : i64, scratch_operands = 0 : i64, tpu.core_type = #tpu.core_type<tc>, window_params = [{transform_indices = @transform_0, window_bounds = array<i64: 8, 8, 1>}, {pipeline_mode = #tpu.pipeline_mode<synchronous>, transform_indices = @transform_1, window_bounds = array<i64: 1, 512>}, {pipeline_mode = #tpu.pipeline_mode<synchronous>, transform_indices = @transform_2, window_bounds = array<i64: 1, 512>}, {pipeline_mode = #tpu.pipeline_mode<synchronous>, transform_indices = @transform_3, window_bounds = array<i64: 128, 512>}, {pipeline_mode = #tpu.pipeline_mode<synchronous>, transform_indices = @transform_4, window_bounds = array<i64: 128, 128>}, {pipeline_mode = #tpu.pipeline_mode<synchronous>, transform_indices = @transform_5, window_bounds = array<i64: 1, 128>}, {transform_indices = @transform_6, window_bounds = array<i64: 8, 128>}]} {
    %c0 = arith.constant 0 : index
    %c0_0 = arith.constant 0 : index
    %0 = vector.load %arg2[%c0, %c0_0] : memref<1x512xf32, #tpu.memory_space<vmem>>, vector<1x512xf32>
    %1 = vector.shape_cast %0 : vector<1x512xf32> to vector<1x512xf32>
    %2 = vector.broadcast %1 : vector<1x512xf32> to vector<8x512xf32>
    %c0_1 = arith.constant 0 : index
    %c0_2 = arith.constant 0 : index
    %3 = vector.load %arg3[%c0_1, %c0_2] : memref<1x512xf32, #tpu.memory_space<vmem>>, vector<1x512xf32>
    %4 = vector.shape_cast %3 : vector<1x512xf32> to vector<1x512xf32>
    %5 = vector.broadcast %4 : vector<1x512xf32> to vector<8x512xf32>
    %cst = arith.constant 0.000000e+00 : f32
    %6 = vector.broadcast %cst : f32 to vector<8x128xf32>
    %cst_3 = arith.constant 0.000000e+00 : f32
    %7 = vector.broadcast %cst_3 : f32 to vector<8x128xf32>
    %c0_i32 = arith.constant 0 : i32
    %8 = arith.index_cast %c0_i32 : i32 to index
    %c0_4 = arith.constant 0 : index
    %c0_5 = arith.constant 0 : index
    %9 = vector.load %arg1[%8, %c0_4, %c0_5] : memref<8x8x1xf32, #tpu.memory_space<vmem>>, vector<1x8x1xf32>
    %10 = vector.shape_cast %9 : vector<1x8x1xf32> to vector<8x1xf32>
    %11 = vector.broadcast %10 : vector<8x1xf32> to vector<8x512xf32>
    %12 = arith.mulf %11, %2 : vector<8x512xf32>
    %13 = arith.addf %12, %5 : vector<8x512xf32>
    %c0_6 = arith.constant 0 : index
    %c0_7 = arith.constant 0 : index
    %14 = vector.load %arg4[%c0_6, %c0_7] : memref<128x512xf32, #tpu.memory_space<vmem>>, vector<128x512xf32>
    %cst_8 = arith.constant dense<0.000000e+00> : vector<8x512xf32>
    %15 = tpu.matmul %6, %14, %cst_8 {dimension_numbers = #tpu.dot_dimension_numbers<[1], [0], [0], [1], [0, 0, 1, 1], [], []>} : vector<8x128xf32>, vector<128x512xf32>, vector<8x512xf32> -> vector<8x512xf32>
    %16 = arith.addf %13, %15 : vector<8x512xf32>
    %17 = vector.extract_strided_slice %16 {offsets = [0, 0], sizes = [8, 384], strides = [1, 1]} : vector<8x512xf32> to vector<8x384xf32>
    %18 = arith.negf %17 : vector<8x384xf32>
    %19 = math.exp %18 : vector<8x384xf32>
    %cst_9 = arith.constant 1.000000e+00 : f32
    %20 = vector.broadcast %cst_9 : f32 to vector<8x384xf32>
    %21 = arith.addf %20, %19 : vector<8x384xf32>
    %22 = arith.divf %20, %21 : vector<8x384xf32>
    %23 = vector.extract_strided_slice %16 {offsets = [0, 384], sizes = [8, 128], strides = [1, 1]} : vector<8x512xf32> to vector<8x128xf32>
    %24 = math.tanh %23 : vector<8x128xf32>
    %25 = vector.extract_strided_slice %22 {offsets = [0, 0], sizes = [8, 128], strides = [1, 1]} : vector<8x384xf32> to vector<8x128xf32>
    %26 = vector.extract_strided_slice %22 {offsets = [0, 128], sizes = [8, 128], strides = [1, 1]} : vector<8x384xf32> to vector<8x128xf32>
    %27 = vector.extract_strided_slice %22 {offsets = [0, 256], sizes = [8, 128], strides = [1, 1]} : vector<8x384xf32> to vector<8x128xf32>
    %28 = arith.mulf %26, %7 : vector<8x128xf32>
    %29 = arith.mulf %25, %24 : vector<8x128xf32>
    %30 = arith.addf %28, %29 : vector<8x128xf32>
    %31 = math.tanh %30 : vector<8x128xf32>
    %32 = arith.mulf %27, %31 : vector<8x128xf32>
    %c1_i32 = arith.constant 1 : i32
    %33 = arith.index_cast %c1_i32 : i32 to index
    %c0_10 = arith.constant 0 : index
    %c0_11 = arith.constant 0 : index
    %34 = vector.load %arg1[%33, %c0_10, %c0_11] : memref<8x8x1xf32, #tpu.memory_space<vmem>>, vector<1x8x1xf32>
    %35 = vector.shape_cast %34 : vector<1x8x1xf32> to vector<8x1xf32>
    %36 = vector.broadcast %35 : vector<8x1xf32> to vector<8x512xf32>
    %37 = arith.mulf %36, %2 : vector<8x512xf32>
    %38 = arith.addf %37, %5 : vector<8x512xf32>
    %c0_12 = arith.constant 0 : index
    %c0_13 = arith.constant 0 : index
    %39 = vector.load %arg4[%c0_12, %c0_13] : memref<128x512xf32, #tpu.memory_space<vmem>>, vector<128x512xf32>
    %cst_14 = arith.constant dense<0.000000e+00> : vector<8x512xf32>
    %40 = tpu.matmul %32, %39, %cst_14 {dimension_numbers = #tpu.dot_dimension_numbers<[1], [0], [0], [1], [0, 0, 1, 1], [], []>} : vector<8x128xf32>, vector<128x512xf32>, vector<8x512xf32> -> vector<8x512xf32>
    %41 = arith.addf %38, %40 : vector<8x512xf32>
    %42 = vector.extract_strided_slice %41 {offsets = [0, 0], sizes = [8, 384], strides = [1, 1]} : vector<8x512xf32> to vector<8x384xf32>
    %43 = arith.negf %42 : vector<8x384xf32>
    %44 = math.exp %43 : vector<8x384xf32>
    %cst_15 = arith.constant 1.000000e+00 : f32
    %45 = vector.broadcast %cst_15 : f32 to vector<8x384xf32>
    %46 = arith.addf %45, %44 : vector<8x384xf32>
    %47 = arith.divf %45, %46 : vector<8x384xf32>
    %48 = vector.extract_strided_slice %41 {offsets = [0, 384], sizes = [8, 128], strides = [1, 1]} : vector<8x512xf32> to vector<8x128xf32>
    %49 = math.tanh %48 : vector<8x128xf32>
    %50 = vector.extract_strided_slice %47 {offsets = [0, 0], sizes = [8, 128], strides = [1, 1]} : vector<8x384xf32> to vector<8x128xf32>
    %51 = vector.extract_strided_slice %47 {offsets = [0, 128], sizes = [8, 128], strides = [1, 1]} : vector<8x384xf32> to vector<8x128xf32>
    %52 = vector.extract_strided_slice %47 {offsets = [0, 256], sizes = [8, 128], strides = [1, 1]} : vector<8x384xf32> to vector<8x128xf32>
    %53 = arith.mulf %51, %30 : vector<8x128xf32>
    %54 = arith.mulf %50, %49 : vector<8x128xf32>
    %55 = arith.addf %53, %54 : vector<8x128xf32>
    %56 = math.tanh %55 : vector<8x128xf32>
    %57 = arith.mulf %52, %56 : vector<8x128xf32>
    %c2_i32 = arith.constant 2 : i32
    %58 = arith.index_cast %c2_i32 : i32 to index
    %c0_16 = arith.constant 0 : index
    %c0_17 = arith.constant 0 : index
    %59 = vector.load %arg1[%58, %c0_16, %c0_17] : memref<8x8x1xf32, #tpu.memory_space<vmem>>, vector<1x8x1xf32>
    %60 = vector.shape_cast %59 : vector<1x8x1xf32> to vector<8x1xf32>
    %61 = vector.broadcast %60 : vector<8x1xf32> to vector<8x512xf32>
    %62 = arith.mulf %61, %2 : vector<8x512xf32>
    %63 = arith.addf %62, %5 : vector<8x512xf32>
    %c0_18 = arith.constant 0 : index
    %c0_19 = arith.constant 0 : index
    %64 = vector.load %arg4[%c0_18, %c0_19] : memref<128x512xf32, #tpu.memory_space<vmem>>, vector<128x512xf32>
    %cst_20 = arith.constant dense<0.000000e+00> : vector<8x512xf32>
    %65 = tpu.matmul %57, %64, %cst_20 {dimension_numbers = #tpu.dot_dimension_numbers<[1], [0], [0], [1], [0, 0, 1, 1], [], []>} : vector<8x128xf32>, vector<128x512xf32>, vector<8x512xf32> -> vector<8x512xf32>
    %66 = arith.addf %63, %65 : vector<8x512xf32>
    %67 = vector.extract_strided_slice %66 {offsets = [0, 0], sizes = [8, 384], strides = [1, 1]} : vector<8x512xf32> to vector<8x384xf32>
    %68 = arith.negf %67 : vector<8x384xf32>
    %69 = math.exp %68 : vector<8x384xf32>
    %cst_21 = arith.constant 1.000000e+00 : f32
    %70 = vector.broadcast %cst_21 : f32 to vector<8x384xf32>
    %71 = arith.addf %70, %69 : vector<8x384xf32>
    %72 = arith.divf %70, %71 : vector<8x384xf32>
    %73 = vector.extract_strided_slice %66 {offsets = [0, 384], sizes = [8, 128], strides = [1, 1]} : vector<8x512xf32> to vector<8x128xf32>
    %74 = math.tanh %73 : vector<8x128xf32>
    %75 = vector.extract_strided_slice %72 {offsets = [0, 0], sizes = [8, 128], strides = [1, 1]} : vector<8x384xf32> to vector<8x128xf32>
    %76 = vector.extract_strided_slice %72 {offsets = [0, 128], sizes = [8, 128], strides = [1, 1]} : vector<8x384xf32> to vector<8x128xf32>
    %77 = vector.extract_strided_slice %72 {offsets = [0, 256], sizes = [8, 128], strides = [1, 1]} : vector<8x384xf32> to vector<8x128xf32>
    %78 = arith.mulf %76, %55 : vector<8x128xf32>
    %79 = arith.mulf %75, %74 : vector<8x128xf32>
    %80 = arith.addf %78, %79 : vector<8x128xf32>
    %81 = math.tanh %80 : vector<8x128xf32>
    %82 = arith.mulf %77, %81 : vector<8x128xf32>
    %c3_i32 = arith.constant 3 : i32
    %83 = arith.index_cast %c3_i32 : i32 to index
    %c0_22 = arith.constant 0 : index
    %c0_23 = arith.constant 0 : index
    %84 = vector.load %arg1[%83, %c0_22, %c0_23] : memref<8x8x1xf32, #tpu.memory_space<vmem>>, vector<1x8x1xf32>
    %85 = vector.shape_cast %84 : vector<1x8x1xf32> to vector<8x1xf32>
    %86 = vector.broadcast %85 : vector<8x1xf32> to vector<8x512xf32>
    %87 = arith.mulf %86, %2 : vector<8x512xf32>
    %88 = arith.addf %87, %5 : vector<8x512xf32>
    %c0_24 = arith.constant 0 : index
    %c0_25 = arith.constant 0 : index
    %89 = vector.load %arg4[%c0_24, %c0_25] : memref<128x512xf32, #tpu.memory_space<vmem>>, vector<128x512xf32>
    %cst_26 = arith.constant dense<0.000000e+00> : vector<8x512xf32>
    %90 = tpu.matmul %82, %89, %cst_26 {dimension_numbers = #tpu.dot_dimension_numbers<[1], [0], [0], [1], [0, 0, 1, 1], [], []>} : vector<8x128xf32>, vector<128x512xf32>, vector<8x512xf32> -> vector<8x512xf32>
    %91 = arith.addf %88, %90 : vector<8x512xf32>
    %92 = vector.extract_strided_slice %91 {offsets = [0, 0], sizes = [8, 384], strides = [1, 1]} : vector<8x512xf32> to vector<8x384xf32>
    %93 = arith.negf %92 : vector<8x384xf32>
    %94 = math.exp %93 : vector<8x384xf32>
    %cst_27 = arith.constant 1.000000e+00 : f32
    %95 = vector.broadcast %cst_27 : f32 to vector<8x384xf32>
    %96 = arith.addf %95, %94 : vector<8x384xf32>
    %97 = arith.divf %95, %96 : vector<8x384xf32>
    %98 = vector.extract_strided_slice %91 {offsets = [0, 384], sizes = [8, 128], strides = [1, 1]} : vector<8x512xf32> to vector<8x128xf32>
    %99 = math.tanh %98 : vector<8x128xf32>
    %100 = vector.extract_strided_slice %97 {offsets = [0, 0], sizes = [8, 128], strides = [1, 1]} : vector<8x384xf32> to vector<8x128xf32>
    %101 = vector.extract_strided_slice %97 {offsets = [0, 128], sizes = [8, 128], strides = [1, 1]} : vector<8x384xf32> to vector<8x128xf32>
    %102 = vector.extract_strided_slice %97 {offsets = [0, 256], sizes = [8, 128], strides = [1, 1]} : vector<8x384xf32> to vector<8x128xf32>
    %103 = arith.mulf %101, %80 : vector<8x128xf32>
    %104 = arith.mulf %100, %99 : vector<8x128xf32>
    %105 = arith.addf %103, %104 : vector<8x128xf32>
    %106 = math.tanh %105 : vector<8x128xf32>
    %107 = arith.mulf %102, %106 : vector<8x128xf32>
    %c4_i32 = arith.constant 4 : i32
    %108 = arith.index_cast %c4_i32 : i32 to index
    %c0_28 = arith.constant 0 : index
    %c0_29 = arith.constant 0 : index
    %109 = vector.load %arg1[%108, %c0_28, %c0_29] : memref<8x8x1xf32, #tpu.memory_space<vmem>>, vector<1x8x1xf32>
    %110 = vector.shape_cast %109 : vector<1x8x1xf32> to vector<8x1xf32>
    %111 = vector.broadcast %110 : vector<8x1xf32> to vector<8x512xf32>
    %112 = arith.mulf %111, %2 : vector<8x512xf32>
    %113 = arith.addf %112, %5 : vector<8x512xf32>
    %c0_30 = arith.constant 0 : index
    %c0_31 = arith.constant 0 : index
    %114 = vector.load %arg4[%c0_30, %c0_31] : memref<128x512xf32, #tpu.memory_space<vmem>>, vector<128x512xf32>
    %cst_32 = arith.constant dense<0.000000e+00> : vector<8x512xf32>
    %115 = tpu.matmul %107, %114, %cst_32 {dimension_numbers = #tpu.dot_dimension_numbers<[1], [0], [0], [1], [0, 0, 1, 1], [], []>} : vector<8x128xf32>, vector<128x512xf32>, vector<8x512xf32> -> vector<8x512xf32>
    %116 = arith.addf %113, %115 : vector<8x512xf32>
    %117 = vector.extract_strided_slice %116 {offsets = [0, 0], sizes = [8, 384], strides = [1, 1]} : vector<8x512xf32> to vector<8x384xf32>
    %118 = arith.negf %117 : vector<8x384xf32>
    %119 = math.exp %118 : vector<8x384xf32>
    %cst_33 = arith.constant 1.000000e+00 : f32
    %120 = vector.broadcast %cst_33 : f32 to vector<8x384xf32>
    %121 = arith.addf %120, %119 : vector<8x384xf32>
    %122 = arith.divf %120, %121 : vector<8x384xf32>
    %123 = vector.extract_strided_slice %116 {offsets = [0, 384], sizes = [8, 128], strides = [1, 1]} : vector<8x512xf32> to vector<8x128xf32>
    %124 = math.tanh %123 : vector<8x128xf32>
    %125 = vector.extract_strided_slice %122 {offsets = [0, 0], sizes = [8, 128], strides = [1, 1]} : vector<8x384xf32> to vector<8x128xf32>
    %126 = vector.extract_strided_slice %122 {offsets = [0, 128], sizes = [8, 128], strides = [1, 1]} : vector<8x384xf32> to vector<8x128xf32>
    %127 = vector.extract_strided_slice %122 {offsets = [0, 256], sizes = [8, 128], strides = [1, 1]} : vector<8x384xf32> to vector<8x128xf32>
    %128 = arith.mulf %126, %105 : vector<8x128xf32>
    %129 = arith.mulf %125, %124 : vector<8x128xf32>
    %130 = arith.addf %128, %129 : vector<8x128xf32>
    %131 = math.tanh %130 : vector<8x128xf32>
    %132 = arith.mulf %127, %131 : vector<8x128xf32>
    %c5_i32 = arith.constant 5 : i32
    %133 = arith.index_cast %c5_i32 : i32 to index
    %c0_34 = arith.constant 0 : index
    %c0_35 = arith.constant 0 : index
    %134 = vector.load %arg1[%133, %c0_34, %c0_35] : memref<8x8x1xf32, #tpu.memory_space<vmem>>, vector<1x8x1xf32>
    %135 = vector.shape_cast %134 : vector<1x8x1xf32> to vector<8x1xf32>
    %136 = vector.broadcast %135 : vector<8x1xf32> to vector<8x512xf32>
    %137 = arith.mulf %136, %2 : vector<8x512xf32>
    %138 = arith.addf %137, %5 : vector<8x512xf32>
    %c0_36 = arith.constant 0 : index
    %c0_37 = arith.constant 0 : index
    %139 = vector.load %arg4[%c0_36, %c0_37] : memref<128x512xf32, #tpu.memory_space<vmem>>, vector<128x512xf32>
    %cst_38 = arith.constant dense<0.000000e+00> : vector<8x512xf32>
    %140 = tpu.matmul %132, %139, %cst_38 {dimension_numbers = #tpu.dot_dimension_numbers<[1], [0], [0], [1], [0, 0, 1, 1], [], []>} : vector<8x128xf32>, vector<128x512xf32>, vector<8x512xf32> -> vector<8x512xf32>
    %141 = arith.addf %138, %140 : vector<8x512xf32>
    %142 = vector.extract_strided_slice %141 {offsets = [0, 0], sizes = [8, 384], strides = [1, 1]} : vector<8x512xf32> to vector<8x384xf32>
    %143 = arith.negf %142 : vector<8x384xf32>
    %144 = math.exp %143 : vector<8x384xf32>
    %cst_39 = arith.constant 1.000000e+00 : f32
    %145 = vector.broadcast %cst_39 : f32 to vector<8x384xf32>
    %146 = arith.addf %145, %144 : vector<8x384xf32>
    %147 = arith.divf %145, %146 : vector<8x384xf32>
    %148 = vector.extract_strided_slice %141 {offsets = [0, 384], sizes = [8, 128], strides = [1, 1]} : vector<8x512xf32> to vector<8x128xf32>
    %149 = math.tanh %148 : vector<8x128xf32>
    %150 = vector.extract_strided_slice %147 {offsets = [0, 0], sizes = [8, 128], strides = [1, 1]} : vector<8x384xf32> to vector<8x128xf32>
    %151 = vector.extract_strided_slice %147 {offsets = [0, 128], sizes = [8, 128], strides = [1, 1]} : vector<8x384xf32> to vector<8x128xf32>
    %152 = vector.extract_strided_slice %147 {offsets = [0, 256], sizes = [8, 128], strides = [1, 1]} : vector<8x384xf32> to vector<8x128xf32>
    %153 = arith.mulf %151, %130 : vector<8x128xf32>
    %154 = arith.mulf %150, %149 : vector<8x128xf32>
    %155 = arith.addf %153, %154 : vector<8x128xf32>
    %156 = math.tanh %155 : vector<8x128xf32>
    %157 = arith.mulf %152, %156 : vector<8x128xf32>
    %c6_i32 = arith.constant 6 : i32
    %158 = arith.index_cast %c6_i32 : i32 to index
    %c0_40 = arith.constant 0 : index
    %c0_41 = arith.constant 0 : index
    %159 = vector.load %arg1[%158, %c0_40, %c0_41] : memref<8x8x1xf32, #tpu.memory_space<vmem>>, vector<1x8x1xf32>
    %160 = vector.shape_cast %159 : vector<1x8x1xf32> to vector<8x1xf32>
    %161 = vector.broadcast %160 : vector<8x1xf32> to vector<8x512xf32>
    %162 = arith.mulf %161, %2 : vector<8x512xf32>
    %163 = arith.addf %162, %5 : vector<8x512xf32>
    %c0_42 = arith.constant 0 : index
    %c0_43 = arith.constant 0 : index
    %164 = vector.load %arg4[%c0_42, %c0_43] : memref<128x512xf32, #tpu.memory_space<vmem>>, vector<128x512xf32>
    %cst_44 = arith.constant dense<0.000000e+00> : vector<8x512xf32>
    %165 = tpu.matmul %157, %164, %cst_44 {dimension_numbers = #tpu.dot_dimension_numbers<[1], [0], [0], [1], [0, 0, 1, 1], [], []>} : vector<8x128xf32>, vector<128x512xf32>, vector<8x512xf32> -> vector<8x512xf32>
    %166 = arith.addf %163, %165 : vector<8x512xf32>
    %167 = vector.extract_strided_slice %166 {offsets = [0, 0], sizes = [8, 384], strides = [1, 1]} : vector<8x512xf32> to vector<8x384xf32>
    %168 = arith.negf %167 : vector<8x384xf32>
    %169 = math.exp %168 : vector<8x384xf32>
    %cst_45 = arith.constant 1.000000e+00 : f32
    %170 = vector.broadcast %cst_45 : f32 to vector<8x384xf32>
    %171 = arith.addf %170, %169 : vector<8x384xf32>
    %172 = arith.divf %170, %171 : vector<8x384xf32>
    %173 = vector.extract_strided_slice %166 {offsets = [0, 384], sizes = [8, 128], strides = [1, 1]} : vector<8x512xf32> to vector<8x128xf32>
    %174 = math.tanh %173 : vector<8x128xf32>
    %175 = vector.extract_strided_slice %172 {offsets = [0, 0], sizes = [8, 128], strides = [1, 1]} : vector<8x384xf32> to vector<8x128xf32>
    %176 = vector.extract_strided_slice %172 {offsets = [0, 128], sizes = [8, 128], strides = [1, 1]} : vector<8x384xf32> to vector<8x128xf32>
    %177 = vector.extract_strided_slice %172 {offsets = [0, 256], sizes = [8, 128], strides = [1, 1]} : vector<8x384xf32> to vector<8x128xf32>
    %178 = arith.mulf %176, %155 : vector<8x128xf32>
    %179 = arith.mulf %175, %174 : vector<8x128xf32>
    %180 = arith.addf %178, %179 : vector<8x128xf32>
    %181 = math.tanh %180 : vector<8x128xf32>
    %182 = arith.mulf %177, %181 : vector<8x128xf32>
    %c7_i32 = arith.constant 7 : i32
    %183 = arith.index_cast %c7_i32 : i32 to index
    %c0_46 = arith.constant 0 : index
    %c0_47 = arith.constant 0 : index
    %184 = vector.load %arg1[%183, %c0_46, %c0_47] : memref<8x8x1xf32, #tpu.memory_space<vmem>>, vector<1x8x1xf32>
    %185 = vector.shape_cast %184 : vector<1x8x1xf32> to vector<8x1xf32>
    %186 = vector.broadcast %185 : vector<8x1xf32> to vector<8x512xf32>
    %187 = arith.mulf %186, %2 : vector<8x512xf32>
    %188 = arith.addf %187, %5 : vector<8x512xf32>
    %c0_48 = arith.constant 0 : index
    %c0_49 = arith.constant 0 : index
    %189 = vector.load %arg4[%c0_48, %c0_49] : memref<128x512xf32, #tpu.memory_space<vmem>>, vector<128x512xf32>
    %cst_50 = arith.constant dense<0.000000e+00> : vector<8x512xf32>
    %190 = tpu.matmul %182, %189, %cst_50 {dimension_numbers = #tpu.dot_dimension_numbers<[1], [0], [0], [1], [0, 0, 1, 1], [], []>} : vector<8x128xf32>, vector<128x512xf32>, vector<8x512xf32> -> vector<8x512xf32>
    %191 = arith.addf %188, %190 : vector<8x512xf32>
    %192 = vector.extract_strided_slice %191 {offsets = [0, 0], sizes = [8, 384], strides = [1, 1]} : vector<8x512xf32> to vector<8x384xf32>
    %193 = arith.negf %192 : vector<8x384xf32>
    %194 = math.exp %193 : vector<8x384xf32>
    %cst_51 = arith.constant 1.000000e+00 : f32
    %195 = vector.broadcast %cst_51 : f32 to vector<8x384xf32>
    %196 = arith.addf %195, %194 : vector<8x384xf32>
    %197 = arith.divf %195, %196 : vector<8x384xf32>
    %198 = vector.extract_strided_slice %191 {offsets = [0, 384], sizes = [8, 128], strides = [1, 1]} : vector<8x512xf32> to vector<8x128xf32>
    %199 = math.tanh %198 : vector<8x128xf32>
    %200 = vector.extract_strided_slice %197 {offsets = [0, 0], sizes = [8, 128], strides = [1, 1]} : vector<8x384xf32> to vector<8x128xf32>
    %201 = vector.extract_strided_slice %197 {offsets = [0, 128], sizes = [8, 128], strides = [1, 1]} : vector<8x384xf32> to vector<8x128xf32>
    %202 = vector.extract_strided_slice %197 {offsets = [0, 256], sizes = [8, 128], strides = [1, 1]} : vector<8x384xf32> to vector<8x128xf32>
    %203 = arith.mulf %201, %180 : vector<8x128xf32>
    %204 = arith.mulf %200, %199 : vector<8x128xf32>
    %205 = arith.addf %203, %204 : vector<8x128xf32>
    %206 = math.tanh %205 : vector<8x128xf32>
    %207 = arith.mulf %202, %206 : vector<8x128xf32>
    %c8_i32 = arith.constant 8 : i32
    %c0_52 = arith.constant 0 : index
    %c0_53 = arith.constant 0 : index
    %208 = vector.load %arg5[%c0_52, %c0_53] : memref<128x128xf32, #tpu.memory_space<vmem>>, vector<128x128xf32>
    %cst_54 = arith.constant dense<0.000000e+00> : vector<8x128xf32>
    %209 = tpu.matmul %207, %208, %cst_54 {dimension_numbers = #tpu.dot_dimension_numbers<[1], [0], [0], [1], [0, 0, 1, 1], [], []>} : vector<8x128xf32>, vector<128x128xf32>, vector<8x128xf32> -> vector<8x128xf32>
    %c0_55 = arith.constant 0 : index
    %c0_56 = arith.constant 0 : index
    %210 = vector.load %arg6[%c0_55, %c0_56] : memref<1x128xf32, #tpu.memory_space<vmem>>, vector<1x128xf32>
    %211 = vector.broadcast %210 : vector<1x128xf32> to vector<8x128xf32>
    %212 = arith.addf %209, %211 : vector<8x128xf32>
    %c0_57 = arith.constant 0 : index
    %c0_58 = arith.constant 0 : index
    %213 = vector.load %arg7[%c0_57, %c0_58] : memref<8x128xf32, #tpu.memory_space<vmem>>, vector<8x128xf32>
    tpu.vector_store %arg7[%c0_57, %c0_58], %212 {strides = array<i32>} : memref<8x128xf32, #tpu.memory_space<vmem>>, vector<8x128xf32>,
    return
  }
  func.func @transform_0(%arg0: i32) -> (i32, i32, i32) {
    %c0_i32 = arith.constant 0 : i32
    %c0_i32_0 = arith.constant 0 : i32
    %c0_i32_1 = arith.constant 0 : i32
    return %c0_i32, %arg0, %c0_i32_0 : i32, i32, i32
  }
  func.func @transform_1(%arg0: i32) -> (i32, i32) {
    %c0_i32 = arith.constant 0 : i32
    %c0_i32_0 = arith.constant 0 : i32
    %c0_i32_1 = arith.constant 0 : i32
    return %c0_i32, %c0_i32_0 : i32, i32
  }
  func.func @transform_2(%arg0: i32) -> (i32, i32) {
    %c0_i32 = arith.constant 0 : i32
    %c0_i32_0 = arith.constant 0 : i32
    %c0_i32_1 = arith.constant 0 : i32
    return %c0_i32, %c0_i32_0 : i32, i32
  }
  func.func @transform_3(%arg0: i32) -> (i32, i32) {
    %c0_i32 = arith.constant 0 : i32
    %c0_i32_0 = arith.constant 0 : i32
    %c0_i32_1 = arith.constant 0 : i32
    return %c0_i32, %c0_i32_0 : i32, i32
  }
  func.func @transform_4(%arg0: i32) -> (i32, i32) {
    %c0_i32 = arith.constant 0 : i32
    %c0_i32_0 = arith.constant 0 : i32
    %c0_i32_1 = arith.constant 0 : i32
    return %c0_i32, %c0_i32_0 : i32, i32
  }
  func.func @transform_5(%arg0: i32) -> (i32, i32) {
    %c0_i32 = arith.constant 0 : i32
    %c0_i32_0 = arith.constant 0 : i32
    %c0_i32_1 = arith.constant 0 : i32
    return %c0_i32, %c0_i32_0 : i32, i32
  }
  func.func @transform_6(%arg0: i32) -> (i32, i32) {
    %c0_i32 = arith.constant 0 : i32
    %c0_i32_0 = arith.constant 0 : i32
    return %arg0, %c0_i32 : i32, i32
  }
}

</mosaic_0001>

<llo_original>
// kernel: tpu_custom_call.1
$region0: #{tpu_custom_call.1}
  #allocation0 [shape = 'u32[]', space=smem, size = 0x4, offset = 0x4, fixed_abs, tag = 'smem constant byte address 0x4 - core index']
  #allocation1 [shape = 'u32[144,128]{1,0:T(1,128)}', space=vmem, size = 0x12000, scoped, tag = 'internal scratch']
  %s0 = inlined_call_operand.vmem [shape: f32[8,8,1], index: 0, kind: input, shape index: {}]
  %s1 = inlined_call_operand.vmem [shape: f32[1,512], index: 1, kind: input, shape index: {}]
  %s2 = inlined_call_operand.vmem [shape: f32[1,512], index: 2, kind: input, shape index: {}]
  %s3 = inlined_call_operand.hbm [shape: f32[128,512], index: 3, kind: input, shape index: {}]
  %s4 = inlined_call_operand.hbm [shape: f32[128,128], index: 4, kind: input, shape index: {}]
  %s5 = inlined_call_operand.vmem [shape: f32[1,128], index: 5, kind: input, shape index: {}]
  %s6 = inlined_call_operand.hbm [shape: f32[8,128], index: 6, kind: output, shape index: {}]
  %s7 = sld [smem:[#allocation0]]
  $region42: #{tpu_custom_call.1} parent=0
    _
  %s9 = ssub.s32 1, %s7
  %s10 = scalar_select 0, %s9, %s7
  $region1: #{tpu_custom_call.1} parent=0
    #allocation2 [shape = 'u8[262144]{0}', space=vmem, size = 0x40000, scoped, tag = 'input window, operand 3, single buffered']
    #allocation3 [shape = 's32[1]{0}', space=sflag, size = 0x4, scoped, tag = 'scoped memory for tpu_custom_call.1']
    #allocation4 [shape = 's32[1]{0}', space=sflag, size = 0x4, scoped, tag = 'scoped memory for tpu_custom_call.1']
    #allocation5 [shape = 'u8[65536]{0}', space=vmem, size = 0x10000, scoped, tag = 'input window, operand 4, single buffered']
    #allocation6 [shape = 's32[1]{0}', space=sflag, size = 0x4, scoped, tag = 'scoped memory for tpu_custom_call.1']
    #allocation7 [shape = 'u8[4096]{0}', space=vmem, size = 0x1000, scoped, tag = 'output window, operand 0, single buffered']
    %11 = vsyncpa [#allocation3], 0
    %12 = vsyncpa [#allocation6], 0
    %13 = vsyncpa [#allocation4], 0
    // Predicated region
    $region2: #{tpu_custom_call.1} parent=1 // pred_check
      _
    $region3: #{tpu_custom_call.1} parent=1 // pred_check_branch
      %15 = sbr.rel (0) target = $region5
    $region4: #{tpu_custom_call.1} parent=1 // pred_region
      _
    $region5: #{tpu_custom_call.1} parent=1 // pred_fallthru
      _
    // Predicated region
    $region6: #{tpu_custom_call.1} parent=1 // pred_check
      _
    $region7: #{tpu_custom_call.1} parent=1 // pred_check_branch
      %17 = sbr.rel (0) target = $region9
    $region8: #{tpu_custom_call.1} parent=1 // pred_region
      _
    $region9: #{tpu_custom_call.1} parent=1 // pred_fallthru
      _
    // Predicated region
    $region10: #{tpu_custom_call.1} parent=1 // pred_check
      _
    $region11: #{tpu_custom_call.1} parent=1 // pred_check_branch
      %19 = sbr.rel (0) target = $region13
    $region12: #{tpu_custom_call.1} parent=1 // pred_region
      _
    $region13: #{tpu_custom_call.1} parent=1 // pred_fallthru
      _
    // Predicated region
    $region14: #{tpu_custom_call.1} parent=1 // pred_check
      _
    $region15: #{tpu_custom_call.1} parent=1 // pred_check_branch
      %21 = sbr.rel (0) target = $region17
    $region16: #{tpu_custom_call.1} parent=1 // pred_region
      %s23 = ssub.s32 8192, 8192
      %24 = vsyncadd [#allocation3], %s23
      %s25 = sshll.u32 [#allocation2], 4
      %s26 = int_to_ptr.vmem [resolvable:$true] %s25
      %31 = dma.hbm_to_vmem [thread:$0]  %s3, 8192, %s26, [#allocation3], 512, 512, 32
    $region17: #{tpu_custom_call.1} parent=1 // pred_fallthru
      _
    // Predicated region
    $region18: #{tpu_custom_call.1} parent=1 // pred_check
      _
    $region19: #{tpu_custom_call.1} parent=1 // pred_check_branch
      %33 = sbr.rel (0) target = $region21
    $region20: #{tpu_custom_call.1} parent=1 // pred_region
      %s35 = ssub.s32 2048, 2048
      %36 = vsyncadd [#allocation6], %s35
      %s37 = sshll.u32 [#allocation5], 4
      %s38 = int_to_ptr.vmem [resolvable:$true] %s37
      %43 = dma.hbm_to_vmem [thread:$0]  %s4, 2048, %s38, [#allocation6], 128, 128, 8
    $region21: #{tpu_custom_call.1} parent=1 // pred_fallthru
      _
    // Predicated region
    $region22: #{tpu_custom_call.1} parent=1 // pred_check
      _
    $region23: #{tpu_custom_call.1} parent=1 // pred_check_branch
      %45 = sbr.rel (0) target = $region25
    $region24: #{tpu_custom_call.1} parent=1 // pred_region
      _
    $region25: #{tpu_custom_call.1} parent=1 // pred_fallthru
      _
    // Predicated region
    $region26: #{tpu_custom_call.1} parent=1 // pred_check
      _
    $region27: #{tpu_custom_call.1} parent=1 // pred_check_branch
      %47 = sbr.rel (0) target = $region29
    $region28: #{tpu_custom_call.1} parent=1 // pred_region
      %48 = dma.done [#allocation3], 8192
    $region29: #{tpu_custom_call.1} parent=1 // pred_fallthru
      _
    // Predicated region
    $region30: #{tpu_custom_call.1} parent=1 // pred_check
      _
    $region31: #{tpu_custom_call.1} parent=1 // pred_check_branch
      %50 = sbr.rel (0) target = $region33
    $region32: #{tpu_custom_call.1} parent=1 // pred_region
      %51 = dma.done [#allocation6], 2048
    $region33: #{tpu_custom_call.1} parent=1 // pred_fallthru
      _
    %v52 = vld [vmem:[%s1] sm:$0xf]
    %v54 = vlaneseq
    %v55 = vshrl.u32 %v54, 7
    %v56 = vsub.s32 0, %v55
    %v57 = vrot.slane %v52, %v56
    %v58 = vlaneseq
    %v59 = vshrl.u32 %v58, 7
    %v60 = vsub.s32 1, %v59
    %v61 = vrot.slane %v52, %v60
    %v62 = vlaneseq
    %v63 = vshrl.u32 %v62, 7
    %v64 = vsub.s32 2, %v63
    %v65 = vrot.slane %v52, %v64
    %v66 = vlaneseq
    %v67 = vshrl.u32 %v66, 7
    %v68 = vsub.s32 3, %v67
    %v69 = vrot.slane %v52, %v68
    %v74 = vld [vmem:[%s2] sm:$0xf]
    %v76 = vlaneseq
    %v77 = vshrl.u32 %v76, 7
    %v78 = vsub.s32 0, %v77
    %v79 = vrot.slane %v74, %v78
    %v80 = vlaneseq
    %v81 = vshrl.u32 %v80, 7
    %v82 = vsub.s32 1, %v81
    %v83 = vrot.slane %v74, %v82
    %v84 = vlaneseq
    %v85 = vshrl.u32 %v84, 7
    %v86 = vsub.s32 2, %v85
    %v87 = vrot.slane %v74, %v86
    %v88 = vlaneseq
    %v89 = vshrl.u32 %v88, 7
    %v90 = vsub.s32 3, %v89
    %v91 = vrot.slane %v74, %v90
    %v96 = vld [vmem:[%s0] sm:$0xff]
    %98 = vset.pattern.permute.xlu0 0
    %99 = vperm.xlu0 %98, %v96
    %v100 = vpop.permute.xlu0 %99
    %v102 = vmul.f32 %v100, %v57
    %v103 = vmul.f32 %v100, %v61
    %v104 = vmul.f32 %v100, %v65
    %v105 = vmul.f32 %v100, %v69
    %v106 = vadd.f32 %v102, %v79
    %v107 = vadd.f32 %v103, %v83
    %v108 = vadd.f32 %v104, %v87
    %v109 = vadd.f32 %v105, %v91
    %v110 = vld [vmem:[#allocation2] sm:$0xff]
    %v111 = vld [vmem:[#allocation2 + $0x8] sm:$0xff]
    %v112 = vld [vmem:[#allocation2 + $0x10] sm:$0xff]
    %v113 = vld [vmem:[#allocation2 + $0x18] sm:$0xff]
    %v114 = vld [vmem:[#allocation2 + $0x20] sm:$0xff]
    %v115 = vld [vmem:[#allocation2 + $0x28] sm:$0xff]
    %v116 = vld [vmem:[#allocation2 + $0x30] sm:$0xff]
    %v117 = vld [vmem:[#allocation2 + $0x38] sm:$0xff]
    %v118 = vld [vmem:[#allocation2 + $0x40] sm:$0xff]
    %v119 = vld [vmem:[#allocation2 + $0x48] sm:$0xff]
    %v120 = vld [vmem:[#allocation2 + $0x50] sm:$0xff]
    %v121 = vld [vmem:[#allocation2 + $0x58] sm:$0xff]
    %v122 = vld [vmem:[#allocation2 + $0x60] sm:$0xff]
    %v123 = vld [vmem:[#allocation2 + $0x68] sm:$0xff]
    %v124 = vld [vmem:[#allocation2 + $0x70] sm:$0xff]
    %v125 = vld [vmem:[#allocation2 + $0x78] sm:$0xff]
    %v126 = vld [vmem:[#allocation2 + $0x80] sm:$0xff]
    %v127 = vld [vmem:[#allocation2 + $0x88] sm:$0xff]
    %v128 = vld [vmem:[#allocation2 + $0x90] sm:$0xff]
    %v129 = vld [vmem:[#allocation2 + $0x98] sm:$0xff]
    %v130 = vld [vmem:[#allocation2 + $0xa0] sm:$0xff]
    %v131 = vld [vmem:[#allocation2 + $0xa8] sm:$0xff]
    %v132 = vld [vmem:[#allocation2 + $0xb0] sm:$0xff]
    %v133 = vld [vmem:[#allocation2 + $0xb8] sm:$0xff]
    %v134 = vld [vmem:[#allocation2 + $0xc0] sm:$0xff]
    %v135 = vld [vmem:[#allocation2 + $0xc8] sm:$0xff]
    %v136 = vld [vmem:[#allocation2 + $0xd0] sm:$0xff]
    %v137 = vld [vmem:[#allocation2 + $0xd8] sm:$0xff]
    %v138 = vld [vmem:[#allocation2 + $0xe0] sm:$0xff]
    %v139 = vld [vmem:[#allocation2 + $0xe8] sm:$0xff]
    %v140 = vld [vmem:[#allocation2 + $0xf0] sm:$0xff]
    %v141 = vld [vmem:[#allocation2 + $0xf8] sm:$0xff]
    %v142 = vld [vmem:[#allocation2 + $0x100] sm:$0xff]
    %v143 = vld [vmem:[#allocation2 + $0x108] sm:$0xff]
    %v144 = vld [vmem:[#allocation2 + $0x110] sm:$0xff]
    %v145 = vld [vmem:[#allocation2 + $0x118] sm:$0xff]
    %v146 = vld [vmem:[#allocation2 + $0x120] sm:$0xff]
    %v147 = vld [vmem:[#allocation2 + $0x128] sm:$0xff]
    %v148 = vld [vmem:[#allocation2 + $0x130] sm:$0xff]
    %v149 = vld [vmem:[#allocation2 + $0x138] sm:$0xff]
    %v150 = vld [vmem:[#allocation2 + $0x140] sm:$0xff]
    %v151 = vld [vmem:[#allocation2 + $0x148] sm:$0xff]
    %v152 = vld [vmem:[#allocation2 + $0x150] sm:$0xff]
    %v153 = vld [vmem:[#allocation2 + $0x158] sm:$0xff]
    %v154 = vld [vmem:[#allocation2 + $0x160] sm:$0xff]
    %v155 = vld [vmem:[#allocation2 + $0x168] sm:$0xff]
    %v156 = vld [vmem:[#allocation2 + $0x170] sm:$0xff]
    %v157 = vld [vmem:[#allocation2 + $0x178] sm:$0xff]
    %v158 = vld [vmem:[#allocation2 + $0x180] sm:$0xff]
    %v159 = vld [vmem:[#allocation2 + $0x188] sm:$0xff]
    %v160 = vld [vmem:[#allocation2 + $0x190] sm:$0xff]
    %v161 = vld [vmem:[#allocation2 + $0x198] sm:$0xff]
    %v162 = vld [vmem:[#allocation2 + $0x1a0] sm:$0xff]
    %v163 = vld [vmem:[#allocation2 + $0x1a8] sm:$0xff]
    %v164 = vld [vmem:[#allocation2 + $0x1b0] sm:$0xff]
    %v165 = vld [vmem:[#allocation2 + $0x1b8] sm:$0xff]
    %v166 = vld [vmem:[#allocation2 + $0x1c0] sm:$0xff]
    %v167 = vld [vmem:[#allocation2 + $0x1c8] sm:$0xff]
    %v168 = vld [vmem:[#allocation2 + $0x1d0] sm:$0xff]
    %v169 = vld [vmem:[#allocation2 + $0x1d8] sm:$0xff]
    %v170 = vld [vmem:[#allocation2 + $0x1e0] sm:$0xff]
    %v171 = vld [vmem:[#allocation2 + $0x1e8] sm:$0xff]
    %v172 = vld [vmem:[#allocation2 + $0x1f0] sm:$0xff]
    %v173 = vld [vmem:[#allocation2 + $0x1f8] sm:$0xff]
    %174 = vmatprep.subr.mxu0 %v171
    %175 = vmatpush1.msra.mxu0 %v170
    %176 = vmatprep.subr.mxu0 %v167
    %177 = vmatpush1.msra.mxu0 %v166
    %178 = vmatprep.subr.mxu0 %v163
    %179 = vmatpush1.msra.mxu0 %v162
    %180 = vmatprep.subr.mxu0 %v159
    %181 = vmatpush1.msra.mxu0 %v158
    %182 = vmatprep.subr.mxu0 %v155
    %183 = vmatpush1.msra.mxu0 %v154
    %184 = vmatprep.subr.mxu0 %v151
    %185 = vmatpush1.msra.mxu0 %v150
    %186 = vmatprep.subr.mxu0 %v147
    %187 = vmatpush1.msra.mxu0 %v146
    %188 = vmatprep.subr.mxu0 %v143
    %189 = vmatpush1.msra.mxu0 %v142
    %190 = vmatprep.subr.mxu0 %v139
    %191 = vmatpush1.msra.mxu0 %v138
    %192 = vmatprep.subr.mxu0 %v135
    %193 = vmatpush1.msra.mxu0 %v134
    %194 = vmatprep.subr.mxu0 %v131
    %195 = vmatpush1.msra.mxu0 %v130
    %196 = vmatprep.subr.mxu0 %v127
    %197 = vmatpush1.msra.mxu0 %v126
    %198 = vmatprep.subr.mxu0 %v123
    %199 = vmatpush1.msra.mxu0 %v122
    %200 = vmatprep.subr.mxu0 %v119
    %201 = vmatpush1.msra.mxu0 %v118
    %202 = vmatprep.subr.mxu0 %v115
    %203 = vmatpush1.msra.mxu0 %v114
    %204 = vmatprep.subr.mxu0 %v111
    %205 = vmatpush1.msra.mxu0 %v110
    %206 = vmatprep.subr.mxu0 0.0
    %207 = vmatpush2.msra.mxu0 0.0
    %208 = vmatprep.subr.mxu0 0.0
    %209 = vmatpush2.msra.mxu0 0.0
    %210 = vmatprep.subr.mxu0 0.0
    %211 = vmatpush2.msra.mxu0 0.0
    %212 = vmatprep.subr.mxu0 0.0
    %213 = vmatpush2.msra.mxu0 0.0
    %214 = vmatprep.subr.mxu0 0.0
    %215 = vmatpush2.msra.mxu0 0.0
    %216 = vmatprep.subr.mxu0 0.0
    %217 = vmatpush2.msra.mxu0 0.0
    %218 = vmatprep.subr.mxu0 0.0
    %219 = vmatpush2.msra.mxu0 0.0
    %220 = vmatprep.subr.mxu0 0.0
    %221 = vmatpush2.msra.mxu0 0.0
    %222 = vmatprep.subr.mxu0 0.0
    %223 = vmatpush2.msra.mxu0 0.0
    %224 = vmatprep.subr.mxu0 0.0
    %225 = vmatpush2.msra.mxu0 0.0
    %226 = vmatprep.subr.mxu0 0.0
    %227 = vmatpush2.msra.mxu0 0.0
    %228 = vmatprep.subr.mxu0 0.0
    %229 = vmatpush2.msra.mxu0 0.0
    %230 = vmatprep.subr.mxu0 0.0
    %231 = vmatpush2.msra.mxu0 0.0
    %232 = vmatprep.subr.mxu0 0.0
    %233 = vmatpush2.msra.mxu0 0.0
    %234 = vmatprep.subr.mxu0 0.0
    %235 = vmatpush2.msra.mxu0 0.0
    %236 = vmatprep.subr.mxu0 0.0
    %237 = vmatpush2.msra.mxu0 0.0
    %238 = vmatprep.mubr.f32.mxu0 0.0
    %239 = vmatmul.mubr.f32.gmra.mxu0 0.0
    %v240 = vpop.f32.mrf.mxu0
    %v241 = vadd.f32 0.0, %v240
    %v242 = vpop.f32.mrf.mxu0
    %v243 = vadd.f32 0.0, %v242
    %244 = vdwg.mxu0
    %245 = vmatprep.subr.mxu0 %v173
    %246 = vmatpush1.msra.mxu0 %v172
    %247 = vmatprep.subr.mxu0 %v169
    %248 = vmatpush1.msra.mxu0 %v168
    %249 = vmatprep.subr.mxu0 %v165
    %250 = vmatpush1.msra.mxu0 %v164
    %251 = vmatprep.subr.mxu0 %v161
    %252 = vmatpush1.msra.mxu0 %v160
    %253 = vmatprep.subr.mxu0 %v157
    %254 = vmatpush1.msra.mxu0 %v156
    %255 = vmatprep.subr.mxu0 %v153
    %256 = vmatpush1.msra.mxu0 %v152
    %257 = vmatprep.subr.mxu0 %v149
    %258 = vmatpush1.msra.mxu0 %v148
    %259 = vmatprep.subr.mxu0 %v145
    %260 = vmatpush1.msra.mxu0 %v144
    %261 = vmatprep.subr.mxu0 %v141
    %262 = vmatpush1.msra.mxu0 %v140
    %263 = vmatprep.subr.mxu0 %v137
    %264 = vmatpush1.msra.mxu0 %v136
    %265 = vmatprep.subr.mxu0 %v133
    %266 = vmatpush1.msra.mxu0 %v132
    %267 = vmatprep.subr.mxu0 %v129
    %268 = vmatpush1.msra.mxu0 %v128
    %269 = vmatprep.subr.mxu0 %v125
    %270 = vmatpush1.msra.mxu0 %v124
    %271 = vmatprep.subr.mxu0 %v121
    %272 = vmatpush1.msra.mxu0 %v120
    %273 = vmatprep.subr.mxu0 %v117
    %274 = vmatpush1.msra.mxu0 %v116
    %275 = vmatprep.subr.mxu0 %v113
    %276 = vmatpush1.msra.mxu0 %v112
    %277 = vmatprep.subr.mxu0 0.0
    %278 = vmatpush2.msra.mxu0 0.0
    %279 = vmatprep.subr.mxu0 0.0
    %280 = vmatpush2.msra.mxu0 0.0
    %281 = vmatprep.subr.mxu0 0.0
    %282 = vmatpush2.msra.mxu0 0.0
    %283 = vmatprep.subr.mxu0 0.0
    %284 = vmatpush2.msra.mxu0 0.0
    %285 = vmatprep.subr.mxu0 0.0
    %286 = vmatpush2.msra.mxu0 0.0
    %287 = vmatprep.subr.mxu0 0.0
    %288 = vmatpush2.msra.mxu0 0.0
    %289 = vmatprep.subr.mxu0 0.0
    %290 = vmatpush2.msra.mxu0 0.0
    %291 = vmatprep.subr.mxu0 0.0
    %292 = vmatpush2.msra.mxu0 0.0
    %293 = vmatprep.subr.mxu0 0.0
    %294 = vmatpush2.msra.mxu0 0.0
    %295 = vmatprep.subr.mxu0 0.0
    %296 = vmatpush2.msra.mxu0 0.0
    %297 = vmatprep.subr.mxu0 0.0
    %298 = vmatpush2.msra.mxu0 0.0
    %299 = vmatprep.subr.mxu0 0.0
    %300 = vmatpush2.msra.mxu0 0.0
    %301 = vmatprep.subr.mxu0 0.0
    %302 = vmatpush2.msra.mxu0 0.0
    %303 = vmatprep.subr.mxu0 0.0
    %304 = vmatpush2.msra.mxu0 0.0
    %305 = vmatprep.subr.mxu0 0.0
    %306 = vmatpush2.msra.mxu0 0.0
    %307 = vmatprep.subr.mxu0 0.0
    %308 = vmatpush2.msra.mxu0 0.0
    %309 = vmatprep.mubr.f32.mxu0 0.0
    %310 = vmatmul.mubr.f32.gmra.mxu0 0.0
    %v311 = vpop.f32.mrf.mxu0
    %v312 = vadd.f32 0.0, %v311
    %v313 = vpop.f32.mrf.mxu0
    %v314 = vadd.f32 0.0, %v313
    %315 = vdwg.mxu0
    %v316 = vadd.f32 %v106, %v241
    %v317 = vadd.f32 %v107, %v243
    %v318 = vadd.f32 %v108, %v312
    %v319 = vadd.f32 %v109, %v314
    %v320 = vxor.u32 %v316, 2147483648
    %v321 = vxor.u32 %v317, 2147483648
    %v322 = vxor.u32 %v318, 2147483648
    %v323 = vmul.f32 %v320, 1.442695
    %v324 = vpow.pop %v323
    %v325 = vmul.f32 %v321, 1.442695
    %v326 = vpow.pop %v325
    %v327 = vmul.f32 %v322, 1.442695
    %v328 = vpow.pop %v327
    %v329 = vadd.f32 %v324, 1.0
    %v330 = vadd.f32 %v326, 1.0
    %v331 = vadd.f32 %v328, 1.0
    %v332 = vrcp.pop %v329
    %v333 = vmul.f32 1.0, %v332
    %v334 = vrcp.pop %v330
    %v335 = vmul.f32 1.0, %v334
    %v336 = vrcp.pop %v331
    %v337 = vmul.f32 1.0, %v336
    %v338 = vtanh.pop %v319
    %v339 = vmul.f32 %v335, 0.0
    %v340 = vmul.f32 %v333, %v338
    %v341 = vadd.f32 %v339, %v340
    %v342 = vtanh.pop %v341
    %v343 = vmul.f32 %v337, %v342
    %s344 = scalar_lea.vmem %s0, 8
    %v345 = vld [vmem:[%s344] sm:$0xff]
    %347 = vset.pattern.permute.xlu0 0
    %348 = vperm.xlu0 %347, %v345
    %v349 = vpop.permute.xlu0 %348
    %v351 = vmul.f32 %v349, %v57
    %v352 = vmul.f32 %v349, %v61
    %v353 = vmul.f32 %v349, %v65
    %v354 = vmul.f32 %v349, %v69
    %v355 = vadd.f32 %v351, %v79
    %v356 = vadd.f32 %v352, %v83
    %v357 = vadd.f32 %v353, %v87
    %v358 = vadd.f32 %v354, %v91
    %359 = vmatprep.subr.mxu0 %v171
    %360 = vmatpush1.msra.mxu0 %v170
    %361 = vmatprep.subr.mxu0 %v167
    %362 = vmatpush1.msra.mxu0 %v166
    %363 = vmatprep.subr.mxu0 %v163
    %364 = vmatpush1.msra.mxu0 %v162
    %365 = vmatprep.subr.mxu0 %v159
    %366 = vmatpush1.msra.mxu0 %v158
    %367 = vmatprep.subr.mxu0 %v155
    %368 = vmatpush1.msra.mxu0 %v154
    %369 = vmatprep.subr.mxu0 %v151
    %370 = vmatpush1.msra.mxu0 %v150
    %371 = vmatprep.subr.mxu0 %v147
    %372 = vmatpush1.msra.mxu0 %v146
    %373 = vmatprep.subr.mxu0 %v143
    %374 = vmatpush1.msra.mxu0 %v142
    %375 = vmatprep.subr.mxu0 %v139
    %376 = vmatpush1.msra.mxu0 %v138
    %377 = vmatprep.subr.mxu0 %v135
    %378 = vmatpush1.msra.mxu0 %v134
    %379 = vmatprep.subr.mxu0 %v131
    %380 = vmatpush1.msra.mxu0 %v130
    %381 = vmatprep.subr.mxu0 %v127
    %382 = vmatpush1.msra.mxu0 %v126
    %383 = vmatprep.subr.mxu0 %v123
    %384 = vmatpush1.msra.mxu0 %v122
    %385 = vmatprep.subr.mxu0 %v119
    %386 = vmatpush1.msra.mxu0 %v118
    %387 = vmatprep.subr.mxu0 %v115
    %388 = vmatpush1.msra.mxu0 %v114
    %389 = vmatprep.subr.mxu0 %v111
    %390 = vmatpush1.msra.mxu0 %v110
    %391 = vmatprep.subr.mxu0 0.0
    %392 = vmatpush2.msra.mxu0 0.0
    %393 = vmatprep.subr.mxu0 0.0
    %394 = vmatpush2.msra.mxu0 0.0
    %395 = vmatprep.subr.mxu0 0.0
    %396 = vmatpush2.msra.mxu0 0.0
    %397 = vmatprep.subr.mxu0 0.0
    %398 = vmatpush2.msra.mxu0 0.0
    %399 = vmatprep.subr.mxu0 0.0
    %400 = vmatpush2.msra.mxu0 0.0
    %401 = vmatprep.subr.mxu0 0.0
    %402 = vmatpush2.msra.mxu0 0.0
    %403 = vmatprep.subr.mxu0 0.0
    %404 = vmatpush2.msra.mxu0 0.0
    %405 = vmatprep.subr.mxu0 0.0
    %406 = vmatpush2.msra.mxu0 0.0
    %407 = vmatprep.subr.mxu0 0.0
    %408 = vmatpush2.msra.mxu0 0.0
    %409 = vmatprep.subr.mxu0 0.0
    %410 = vmatpush2.msra.mxu0 0.0
    %411 = vmatprep.subr.mxu0 0.0
    %412 = vmatpush2.msra.mxu0 0.0
    %413 = vmatprep.subr.mxu0 0.0
    %414 = vmatpush2.msra.mxu0 0.0
    %415 = vmatprep.subr.mxu0 0.0
    %416 = vmatpush2.msra.mxu0 0.0
    %417 = vmatprep.subr.mxu0 0.0
    %418 = vmatpush2.msra.mxu0 0.0
    %419 = vmatprep.subr.mxu0 0.0
    %420 = vmatpush2.msra.mxu0 0.0
    %421 = vmatprep.subr.mxu0 0.0
    %422 = vmatpush2.msra.mxu0 0.0
    %423 = vmatprep.mubr.f32.mxu0 0.0
    %424 = vmatmul.mubr.f32.gmra.mxu0 %v343
    %v425 = vpop.f32.mrf.mxu0
    %v426 = vadd.f32 0.0, %v425
    %v427 = vpop.f32.mrf.mxu0
    %v428 = vadd.f32 0.0, %v427
    %429 = vdwg.mxu0
    %430 = vmatprep.subr.mxu0 %v173
    %431 = vmatpush1.msra.mxu0 %v172
    %432 = vmatprep.subr.mxu0 %v169
    %433 = vmatpush1.msra.mxu0 %v168
    %434 = vmatprep.subr.mxu0 %v165
    %435 = vmatpush1.msra.mxu0 %v164
    %436 = vmatprep.subr.mxu0 %v161
    %437 = vmatpush1.msra.mxu0 %v160
    %438 = vmatprep.subr.mxu0 %v157
    %439 = vmatpush1.msra.mxu0 %v156
    %440 = vmatprep.subr.mxu0 %v153
    %441 = vmatpush1.msra.mxu0 %v152
    %442 = vmatprep.subr.mxu0 %v149
    %443 = vmatpush1.msra.mxu0 %v148
    %444 = vmatprep.subr.mxu0 %v145
    %445 = vmatpush1.msra.mxu0 %v144
    %446 = vmatprep.subr.mxu0 %v141
    %447 = vmatpush1.msra.mxu0 %v140
    %448 = vmatprep.subr.mxu0 %v137
    %449 = vmatpush1.msra.mxu0 %v136
    %450 = vmatprep.subr.mxu0 %v133
    %451 = vmatpush1.msra.mxu0 %v132
    %452 = vmatprep.subr.mxu0 %v129
    %453 = vmatpush1.msra.mxu0 %v128
    %454 = vmatprep.subr.mxu0 %v125
    %455 = vmatpush1.msra.mxu0 %v124
    %456 = vmatprep.subr.mxu0 %v121
    %457 = vmatpush1.msra.mxu0 %v120
    %458 = vmatprep.subr.mxu0 %v117
    %459 = vmatpush1.msra.mxu0 %v116
    %460 = vmatprep.subr.mxu0 %v113
    %461 = vmatpush1.msra.mxu0 %v112
    %462 = vmatprep.subr.mxu0 0.0
    %463 = vmatpush2.msra.mxu0 0.0
    %464 = vmatprep.subr.mxu0 0.0
    %465 = vmatpush2.msra.mxu0 0.0
    %466 = vmatprep.subr.mxu0 0.0
    %467 = vmatpush2.msra.mxu0 0.0
    %468 = vmatprep.subr.mxu0 0.0
    %469 = vmatpush2.msra.mxu0 0.0
    %470 = vmatprep.subr.mxu0 0.0
    %471 = vmatpush2.msra.mxu0 0.0
    %472 = vmatprep.subr.mxu0 0.0
    %473 = vmatpush2.msra.mxu0 0.0
    %474 = vmatprep.subr.mxu0 0.0
    %475 = vmatpush2.msra.mxu0 0.0
    %476 = vmatprep.subr.mxu0 0.0
    %477 = vmatpush2.msra.mxu0 0.0
    %478 = vmatprep.subr.mxu0 0.0
    %479 = vmatpush2.msra.mxu0 0.0
    %480 = vmatprep.subr.mxu0 0.0
    %481 = vmatpush2.msra.mxu0 0.0
    %482 = vmatprep.subr.mxu0 0.0
    %483 = vmatpush2.msra.mxu0 0.0
    %484 = vmatprep.subr.mxu0 0.0
    %485 = vmatpush2.msra.mxu0 0.0
    %486 = vmatprep.subr.mxu0 0.0
    %487 = vmatpush2.msra.mxu0 0.0
    %488 = vmatprep.subr.mxu0 0.0
    %489 = vmatpush2.msra.mxu0 0.0
    %490 = vmatprep.subr.mxu0 0.0
    %491 = vmatpush2.msra.mxu0 0.0
    %492 = vmatprep.subr.mxu0 0.0
    %493 = vmatpush2.msra.mxu0 0.0
    %494 = vmatprep.mubr.f32.mxu0 0.0
    %495 = vmatmul.mubr.f32.gmra.mxu0 %v343
    %v496 = vpop.f32.mrf.mxu0
    %v497 = vadd.f32 0.0, %v496
    %v498 = vpop.f32.mrf.mxu0
    %v499 = vadd.f32 0.0, %v498
    %500 = vdwg.mxu0
    %v501 = vadd.f32 %v355, %v426
    %v502 = vadd.f32 %v356, %v428
    %v503 = vadd.f32 %v357, %v497
    %v504 = vadd.f32 %v358, %v499
    %v505 = vxor.u32 %v501, 2147483648
    %v506 = vxor.u32 %v502, 2147483648
    %v507 = vxor.u32 %v503, 2147483648
    %v508 = vmul.f32 %v505, 1.442695
    %v509 = vpow.pop %v508
    %v510 = vmul.f32 %v506, 1.442695
    %v511 = vpow.pop %v510
    %v512 = vmul.f32 %v507, 1.442695
    %v513 = vpow.pop %v512
    %v514 = vadd.f32 %v509, 1.0
    %v515 = vadd.f32 %v511, 1.0
    %v516 = vadd.f32 %v513, 1.0
    %v517 = vrcp.pop %v514
    %v518 = vmul.f32 1.0, %v517
    %v519 = vrcp.pop %v515
    %v520 = vmul.f32 1.0, %v519
    %v521 = vrcp.pop %v516
    %v522 = vmul.f32 1.0, %v521
    %v523 = vtanh.pop %v504
    %v524 = vmul.f32 %v520, %v341
    %v525 = vmul.f32 %v518, %v523
    %v526 = vadd.f32 %v524, %v525
    %v527 = vtanh.pop %v526
    %v528 = vmul.f32 %v522, %v527
    %s529 = scalar_lea.vmem %s0, 16
    %v530 = vld [vmem:[%s529] sm:$0xff]
    %532 = vset.pattern.permute.xlu0 0
    %533 = vperm.xlu0 %532, %v530
    %v534 = vpop.permute.xlu0 %533
    %v536 = vmul.f32 %v534, %v57
    %v537 = vmul.f32 %v534, %v61
    %v538 = vmul.f32 %v534, %v65
    %v539 = vmul.f32 %v534, %v69
    %v540 = vadd.f32 %v536, %v79
    %v541 = vadd.f32 %v537, %v83
    %v542 = vadd.f32 %v538, %v87
    %v543 = vadd.f32 %v539, %v91
    %544 = vmatprep.subr.mxu0 %v171
    %545 = vmatpush1.msra.mxu0 %v170
    %546 = vmatprep.subr.mxu0 %v167
    %547 = vmatpush1.msra.mxu0 %v166
    %548 = vmatprep.subr.mxu0 %v163
    %549 = vmatpush1.msra.mxu0 %v162
    %550 = vmatprep.subr.mxu0 %v159
    %551 = vmatpush1.msra.mxu0 %v158
    %552 = vmatprep.subr.mxu0 %v155
    %553 = vmatpush1.msra.mxu0 %v154
    %554 = vmatprep.subr.mxu0 %v151
    %555 = vmatpush1.msra.mxu0 %v150
    %556 = vmatprep.subr.mxu0 %v147
    %557 = vmatpush1.msra.mxu0 %v146
    %558 = vmatprep.subr.mxu0 %v143
    %559 = vmatpush1.msra.mxu0 %v142
    %560 = vmatprep.subr.mxu0 %v139
    %561 = vmatpush1.msra.mxu0 %v138
    %562 = vmatprep.subr.mxu0 %v135
    %563 = vmatpush1.msra.mxu0 %v134
    %564 = vmatprep.subr.mxu0 %v131
    %565 = vmatpush1.msra.mxu0 %v130
    %566 = vmatprep.subr.mxu0 %v127
    %567 = vmatpush1.msra.mxu0 %v126
    %568 = vmatprep.subr.mxu0 %v123
    %569 = vmatpush1.msra.mxu0 %v122
    %570 = vmatprep.subr.mxu0 %v119
    %571 = vmatpush1.msra.mxu0 %v118
    %572 = vmatprep.subr.mxu0 %v115
    %573 = vmatpush1.msra.mxu0 %v114
    %574 = vmatprep.subr.mxu0 %v111
    %575 = vmatpush1.msra.mxu0 %v110
    %576 = vmatprep.subr.mxu0 0.0
    %577 = vmatpush2.msra.mxu0 0.0
    %578 = vmatprep.subr.mxu0 0.0
    %579 = vmatpush2.msra.mxu0 0.0
    %580 = vmatprep.subr.mxu0 0.0
    %581 = vmatpush2.msra.mxu0 0.0
    %582 = vmatprep.subr.mxu0 0.0
    %583 = vmatpush2.msra.mxu0 0.0
    %584 = vmatprep.subr.mxu0 0.0
    %585 = vmatpush2.msra.mxu0 0.0
    %586 = vmatprep.subr.mxu0 0.0
    %587 = vmatpush2.msra.mxu0 0.0
    %588 = vmatprep.subr.mxu0 0.0
    %589 = vmatpush2.msra.mxu0 0.0
    %590 = vmatprep.subr.mxu0 0.0
    %591 = vmatpush2.msra.mxu0 0.0
    %592 = vmatprep.subr.mxu0 0.0
    %593 = vmatpush2.msra.mxu0 0.0
    %594 = vmatprep.subr.mxu0 0.0
    %595 = vmatpush2.msra.mxu0 0.0
    %596 = vmatprep.subr.mxu0 0.0
    %597 = vmatpush2.msra.mxu0 0.0
    %598 = vmatprep.subr.mxu0 0.0
    %599 = vmatpush2.msra.mxu0 0.0
    %600 = vmatprep.subr.mxu0 0.0
    %601 = vmatpush2.msra.mxu0 0.0
    %602 = vmatprep.subr.mxu0 0.0
    %603 = vmatpush2.msra.mxu0 0.0
    %604 = vmatprep.subr.mxu0 0.0
    %605 = vmatpush2.msra.mxu0 0.0
    %606 = vmatprep.subr.mxu0 0.0
    %607 = vmatpush2.msra.mxu0 0.0
    %608 = vmatprep.mubr.f32.mxu0 0.0
    %609 = vmatmul.mubr.f32.gmra.mxu0 %v528
    %v610 = vpop.f32.mrf.mxu0
    %v611 = vadd.f32 0.0, %v610
    %v612 = vpop.f32.mrf.mxu0
    %v613 = vadd.f32 0.0, %v612
    %614 = vdwg.mxu0
    %615 = vmatprep.subr.mxu0 %v173
    %616 = vmatpush1.msra.mxu0 %v172
    %617 = vmatprep.subr.mxu0 %v169
    %618 = vmatpush1.msra.mxu0 %v168
    %619 = vmatprep.subr.mxu0 %v165
    %620 = vmatpush1.msra.mxu0 %v164
    %621 = vmatprep.subr.mxu0 %v161
    %622 = vmatpush1.msra.mxu0 %v160
    %623 = vmatprep.subr.mxu0 %v157
    %624 = vmatpush1.msra.mxu0 %v156
    %625 = vmatprep.subr.mxu0 %v153
    %626 = vmatpush1.msra.mxu0 %v152
    %627 = vmatprep.subr.mxu0 %v149
    %628 = vmatpush1.msra.mxu0 %v148
    %629 = vmatprep.subr.mxu0 %v145
    %630 = vmatpush1.msra.mxu0 %v144
    %631 = vmatprep.subr.mxu0 %v141
    %632 = vmatpush1.msra.mxu0 %v140
    %633 = vmatprep.subr.mxu0 %v137
    %634 = vmatpush1.msra.mxu0 %v136
    %635 = vmatprep.subr.mxu0 %v133
    %636 = vmatpush1.msra.mxu0 %v132
    %637 = vmatprep.subr.mxu0 %v129
    %638 = vmatpush1.msra.mxu0 %v128
    %639 = vmatprep.subr.mxu0 %v125
    %640 = vmatpush1.msra.mxu0 %v124
    %641 = vmatprep.subr.mxu0 %v121
    %642 = vmatpush1.msra.mxu0 %v120
    %643 = vmatprep.subr.mxu0 %v117
    %644 = vmatpush1.msra.mxu0 %v116
    %645 = vmatprep.subr.mxu0 %v113
    %646 = vmatpush1.msra.mxu0 %v112
    %647 = vmatprep.subr.mxu0 0.0
    %648 = vmatpush2.msra.mxu0 0.0
    %649 = vmatprep.subr.mxu0 0.0
    %650 = vmatpush2.msra.mxu0 0.0
    %651 = vmatprep.subr.mxu0 0.0
    %652 = vmatpush2.msra.mxu0 0.0
    %653 = vmatprep.subr.mxu0 0.0
    %654 = vmatpush2.msra.mxu0 0.0
    %655 = vmatprep.subr.mxu0 0.0
    %656 = vmatpush2.msra.mxu0 0.0
    %657 = vmatprep.subr.mxu0 0.0
    %658 = vmatpush2.msra.mxu0 0.0
    %659 = vmatprep.subr.mxu0 0.0
    %660 = vmatpush2.msra.mxu0 0.0
    %661 = vmatprep.subr.mxu0 0.0
    %662 = vmatpush2.msra.mxu0 0.0
    %663 = vmatprep.subr.mxu0 0.0
    %664 = vmatpush2.msra.mxu0 0.0
    %665 = vmatprep.subr.mxu0 0.0
    %666 = vmatpush2.msra.mxu0 0.0
    %667 = vmatprep.subr.mxu0 0.0
    %668 = vmatpush2.msra.mxu0 0.0
    %669 = vmatprep.subr.mxu0 0.0
    %670 = vmatpush2.msra.mxu0 0.0
    %671 = vmatprep.subr.mxu0 0.0
    %672 = vmatpush2.msra.mxu0 0.0
    %673 = vmatprep.subr.mxu0 0.0
    %674 = vmatpush2.msra.mxu0 0.0
    %675 = vmatprep.subr.mxu0 0.0
    %676 = vmatpush2.msra.mxu0 0.0
    %677 = vmatprep.subr.mxu0 0.0
    %678 = vmatpush2.msra.mxu0 0.0
    %679 = vmatprep.mubr.f32.mxu0 0.0
    %680 = vmatmul.mubr.f32.gmra.mxu0 %v528
    %v681 = vpop.f32.mrf.mxu0
    %v682 = vadd.f32 0.0, %v681
    %v683 = vpop.f32.mrf.mxu0
    %v684 = vadd.f32 0.0, %v683
    %685 = vdwg.mxu0
    %v686 = vadd.f32 %v540, %v611
    %v687 = vadd.f32 %v541, %v613
    %v688 = vadd.f32 %v542, %v682
    %v689 = vadd.f32 %v543, %v684
    %v690 = vxor.u32 %v686, 2147483648
    %v691 = vxor.u32 %v687, 2147483648
    %v692 = vxor.u32 %v688, 2147483648
    %v693 = vmul.f32 %v690, 1.442695
    %v694 = vpow.pop %v693
    %v695 = vmul.f32 %v691, 1.442695
    %v696 = vpow.pop %v695
    %v697 = vmul.f32 %v692, 1.442695
    %v698 = vpow.pop %v697
    %v699 = vadd.f32 %v694, 1.0
    %v700 = vadd.f32 %v696, 1.0
    %v701 = vadd.f32 %v698, 1.0
    %v702 = vrcp.pop %v699
    %v703 = vmul.f32 1.0, %v702
    %v704 = vrcp.pop %v700
    %v705 = vmul.f32 1.0, %v704
    %v706 = vrcp.pop %v701
    %v707 = vmul.f32 1.0, %v706
    %v708 = vtanh.pop %v689
    %v709 = vmul.f32 %v705, %v526
    %v710 = vmul.f32 %v703, %v708
    %v711 = vadd.f32 %v709, %v710
    %v712 = vtanh.pop %v711
    %v713 = vmul.f32 %v707, %v712
    %s714 = scalar_lea.vmem %s0, 24
    %v715 = vld [vmem:[%s714] sm:$0xff]
    %717 = vset.pattern.permute.xlu0 0
    %718 = vperm.xlu0 %717, %v715
    %v719 = vpop.permute.xlu0 %718
    %v721 = vmul.f32 %v719, %v57
    %v722 = vmul.f32 %v719, %v61
    %v723 = vmul.f32 %v719, %v65
    %v724 = vmul.f32 %v719, %v69
    %v725 = vadd.f32 %v721, %v79
    %v726 = vadd.f32 %v722, %v83
    %v727 = vadd.f32 %v723, %v87
    %v728 = vadd.f32 %v724, %v91
    %729 = vmatprep.subr.mxu0 %v171
    %730 = vmatpush1.msra.mxu0 %v170
    %731 = vmatprep.subr.mxu0 %v167
    %732 = vmatpush1.msra.mxu0 %v166
    %733 = vmatprep.subr.mxu0 %v163
    %734 = vmatpush1.msra.mxu0 %v162
    %735 = vmatprep.subr.mxu0 %v159
    %736 = vmatpush1.msra.mxu0 %v158
    %737 = vmatprep.subr.mxu0 %v155
    %738 = vmatpush1.msra.mxu0 %v154
    %739 = vmatprep.subr.mxu0 %v151
    %740 = vmatpush1.msra.mxu0 %v150
    %741 = vmatprep.subr.mxu0 %v147
    %742 = vmatpush1.msra.mxu0 %v146
    %743 = vmatprep.subr.mxu0 %v143
    %744 = vmatpush1.msra.mxu0 %v142
    %745 = vmatprep.subr.mxu0 %v139
    %746 = vmatpush1.msra.mxu0 %v138
    %747 = vmatprep.subr.mxu0 %v135
    %748 = vmatpush1.msra.mxu0 %v134
    %749 = vmatprep.subr.mxu0 %v131
    %750 = vmatpush1.msra.mxu0 %v130
    %751 = vmatprep.subr.mxu0 %v127
    %752 = vmatpush1.msra.mxu0 %v126
    %753 = vmatprep.subr.mxu0 %v123
    %754 = vmatpush1.msra.mxu0 %v122
    %755 = vmatprep.subr.mxu0 %v119
    %756 = vmatpush1.msra.mxu0 %v118
    %757 = vmatprep.subr.mxu0 %v115
    %758 = vmatpush1.msra.mxu0 %v114
    %759 = vmatprep.subr.mxu0 %v111
    %760 = vmatpush1.msra.mxu0 %v110
    %761 = vmatprep.subr.mxu0 0.0
    %762 = vmatpush2.msra.mxu0 0.0
    %763 = vmatprep.subr.mxu0 0.0
    %764 = vmatpush2.msra.mxu0 0.0
    %765 = vmatprep.subr.mxu0 0.0
    %766 = vmatpush2.msra.mxu0 0.0
    %767 = vmatprep.subr.mxu0 0.0
    %768 = vmatpush2.msra.mxu0 0.0
    %769 = vmatprep.subr.mxu0 0.0
    %770 = vmatpush2.msra.mxu0 0.0
    %771 = vmatprep.subr.mxu0 0.0
    %772 = vmatpush2.msra.mxu0 0.0
    %773 = vmatprep.subr.mxu0 0.0
    %774 = vmatpush2.msra.mxu0 0.0
    %775 = vmatprep.subr.mxu0 0.0
    %776 = vmatpush2.msra.mxu0 0.0
    %777 = vmatprep.subr.mxu0 0.0
    %778 = vmatpush2.msra.mxu0 0.0
    %779 = vmatprep.subr.mxu0 0.0
    %780 = vmatpush2.msra.mxu0 0.0
    %781 = vmatprep.subr.mxu0 0.0
    %782 = vmatpush2.msra.mxu0 0.0
    %783 = vmatprep.subr.mxu0 0.0
    %784 = vmatpush2.msra.mxu0 0.0
    %785 = vmatprep.subr.mxu0 0.0
    %786 = vmatpush2.msra.mxu0 0.0
    %787 = vmatprep.subr.mxu0 0.0
    %788 = vmatpush2.msra.mxu0 0.0
    %789 = vmatprep.subr.mxu0 0.0
    %790 = vmatpush2.msra.mxu0 0.0
    %791 = vmatprep.subr.mxu0 0.0
    %792 = vmatpush2.msra.mxu0 0.0
    %793 = vmatprep.mubr.f32.mxu0 0.0
    %794 = vmatmul.mubr.f32.gmra.mxu0 %v713
    %v795 = vpop.f32.mrf.mxu0
    %v796 = vadd.f32 0.0, %v795
    %v797 = vpop.f32.mrf.mxu0
    %v798 = vadd.f32 0.0, %v797
    %799 = vdwg.mxu0
    %800 = vmatprep.subr.mxu0 %v173
    %801 = vmatpush1.msra.mxu0 %v172
    %802 = vmatprep.subr.mxu0 %v169
    %803 = vmatpush1.msra.mxu0 %v168
    %804 = vmatprep.subr.mxu0 %v165
    %805 = vmatpush1.msra.mxu0 %v164
    %806 = vmatprep.subr.mxu0 %v161
    %807 = vmatpush1.msra.mxu0 %v160
    %808 = vmatprep.subr.mxu0 %v157
    %809 = vmatpush1.msra.mxu0 %v156
    %810 = vmatprep.subr.mxu0 %v153
    %811 = vmatpush1.msra.mxu0 %v152
    %812 = vmatprep.subr.mxu0 %v149
    %813 = vmatpush1.msra.mxu0 %v148
    %814 = vmatprep.subr.mxu0 %v145
    %815 = vmatpush1.msra.mxu0 %v144
    %816 = vmatprep.subr.mxu0 %v141
    %817 = vmatpush1.msra.mxu0 %v140
    %818 = vmatprep.subr.mxu0 %v137
    %819 = vmatpush1.msra.mxu0 %v136
    %820 = vmatprep.subr.mxu0 %v133
    %821 = vmatpush1.msra.mxu0 %v132
    %822 = vmatprep.subr.mxu0 %v129
    %823 = vmatpush1.msra.mxu0 %v128
    %824 = vmatprep.subr.mxu0 %v125
    %825 = vmatpush1.msra.mxu0 %v124
    %826 = vmatprep.subr.mxu0 %v121
    %827 = vmatpush1.msra.mxu0 %v120
    %828 = vmatprep.subr.mxu0 %v117
    %829 = vmatpush1.msra.mxu0 %v116
    %830 = vmatprep.subr.mxu0 %v113
    %831 = vmatpush1.msra.mxu0 %v112
    %832 = vmatprep.subr.mxu0 0.0
    %833 = vmatpush2.msra.mxu0 0.0
    %834 = vmatprep.subr.mxu0 0.0
    %835 = vmatpush2.msra.mxu0 0.0
    %836 = vmatprep.subr.mxu0 0.0
    %837 = vmatpush2.msra.mxu0 0.0
    %838 = vmatprep.subr.mxu0 0.0
    %839 = vmatpush2.msra.mxu0 0.0
    %840 = vmatprep.subr.mxu0 0.0
    %841 = vmatpush2.msra.mxu0 0.0
    %842 = vmatprep.subr.mxu0 0.0
    %843 = vmatpush2.msra.mxu0 0.0
    %844 = vmatprep.subr.mxu0 0.0
    %845 = vmatpush2.msra.mxu0 0.0
    %846 = vmatprep.subr.mxu0 0.0
    %847 = vmatpush2.msra.mxu0 0.0
    %848 = vmatprep.subr.mxu0 0.0
    %849 = vmatpush2.msra.mxu0 0.0
    %850 = vmatprep.subr.mxu0 0.0
    %851 = vmatpush2.msra.mxu0 0.0
    %852 = vmatprep.subr.mxu0 0.0
    %853 = vmatpush2.msra.mxu0 0.0
    %854 = vmatprep.subr.mxu0 0.0
    %855 = vmatpush2.msra.mxu0 0.0
    %856 = vmatprep.subr.mxu0 0.0
    %857 = vmatpush2.msra.mxu0 0.0
    %858 = vmatprep.subr.mxu0 0.0
    %859 = vmatpush2.msra.mxu0 0.0
    %860 = vmatprep.subr.mxu0 0.0
    %861 = vmatpush2.msra.mxu0 0.0
    %862 = vmatprep.subr.mxu0 0.0
    %863 = vmatpush2.msra.mxu0 0.0
    %864 = vmatprep.mubr.f32.mxu0 0.0
    %865 = vmatmul.mubr.f32.gmra.mxu0 %v713
    %v866 = vpop.f32.mrf.mxu0
    %v867 = vadd.f32 0.0, %v866
    %v868 = vpop.f32.mrf.mxu0
    %v869 = vadd.f32 0.0, %v868
    %870 = vdwg.mxu0
    %v871 = vadd.f32 %v725, %v796
    %v872 = vadd.f32 %v726, %v798
    %v873 = vadd.f32 %v727, %v867
    %v874 = vadd.f32 %v728, %v869
    %v875 = vxor.u32 %v871, 2147483648
    %v876 = vxor.u32 %v872, 2147483648
    %v877 = vxor.u32 %v873, 2147483648
    %v878 = vmul.f32 %v875, 1.442695
    %v879 = vpow.pop %v878
    %v880 = vmul.f32 %v876, 1.442695
    %v881 = vpow.pop %v880
    %v882 = vmul.f32 %v877, 1.442695
    %v883 = vpow.pop %v882
    %v884 = vadd.f32 %v879, 1.0
    %v885 = vadd.f32 %v881, 1.0
    %v886 = vadd.f32 %v883, 1.0
    %v887 = vrcp.pop %v884
    %v888 = vmul.f32 1.0, %v887
    %v889 = vrcp.pop %v885
    %v890 = vmul.f32 1.0, %v889
    %v891 = vrcp.pop %v886
    %v892 = vmul.f32 1.0, %v891
    %v893 = vtanh.pop %v874
    %v894 = vmul.f32 %v890, %v711
    %v895 = vmul.f32 %v888, %v893
    %v896 = vadd.f32 %v894, %v895
    %v897 = vtanh.pop %v896
    %v898 = vmul.f32 %v892, %v897
    %s899 = scalar_lea.vmem %s0, 32
    %v900 = vld [vmem:[%s899] sm:$0xff]
    %902 = vset.pattern.permute.xlu0 0
    %903 = vperm.xlu0 %902, %v900
    %v904 = vpop.permute.xlu0 %903
    %v906 = vmul.f32 %v904, %v57
    %v907 = vmul.f32 %v904, %v61
    %v908 = vmul.f32 %v904, %v65
    %v909 = vmul.f32 %v904, %v69
    %v910 = vadd.f32 %v906, %v79
    %v911 = vadd.f32 %v907, %v83
    %v912 = vadd.f32 %v908, %v87
    %v913 = vadd.f32 %v909, %v91
    %914 = vmatprep.subr.mxu0 %v171
    %915 = vmatpush1.msra.mxu0 %v170
    %916 = vmatprep.subr.mxu0 %v167
    %917 = vmatpush1.msra.mxu0 %v166
    %918 = vmatprep.subr.mxu0 %v163
    %919 = vmatpush1.msra.mxu0 %v162
    %920 = vmatprep.subr.mxu0 %v159
    %921 = vmatpush1.msra.mxu0 %v158
    %922 = vmatprep.subr.mxu0 %v155
    %923 = vmatpush1.msra.mxu0 %v154
    %924 = vmatprep.subr.mxu0 %v151
    %925 = vmatpush1.msra.mxu0 %v150
    %926 = vmatprep.subr.mxu0 %v147
    %927 = vmatpush1.msra.mxu0 %v146
    %928 = vmatprep.subr.mxu0 %v143
    %929 = vmatpush1.msra.mxu0 %v142
    %930 = vmatprep.subr.mxu0 %v139
    %931 = vmatpush1.msra.mxu0 %v138
    %932 = vmatprep.subr.mxu0 %v135
    %933 = vmatpush1.msra.mxu0 %v134
    %934 = vmatprep.subr.mxu0 %v131
    %935 = vmatpush1.msra.mxu0 %v130
    %936 = vmatprep.subr.mxu0 %v127
    %937 = vmatpush1.msra.mxu0 %v126
    %938 = vmatprep.subr.mxu0 %v123
    %939 = vmatpush1.msra.mxu0 %v122
    %940 = vmatprep.subr.mxu0 %v119
    %941 = vmatpush1.msra.mxu0 %v118
    %942 = vmatprep.subr.mxu0 %v115
    %943 = vmatpush1.msra.mxu0 %v114
    %944 = vmatprep.subr.mxu0 %v111
    %945 = vmatpush1.msra.mxu0 %v110
    %946 = vmatprep.subr.mxu0 0.0
    %947 = vmatpush2.msra.mxu0 0.0
    %948 = vmatprep.subr.mxu0 0.0
    %949 = vmatpush2.msra.mxu0 0.0
    %950 = vmatprep.subr.mxu0 0.0
    %951 = vmatpush2.msra.mxu0 0.0
    %952 = vmatprep.subr.mxu0 0.0
    %953 = vmatpush2.msra.mxu0 0.0
    %954 = vmatprep.subr.mxu0 0.0
    %955 = vmatpush2.msra.mxu0 0.0
    %956 = vmatprep.subr.mxu0 0.0
    %957 = vmatpush2.msra.mxu0 0.0
    %958 = vmatprep.subr.mxu0 0.0
    %959 = vmatpush2.msra.mxu0 0.0
    %960 = vmatprep.subr.mxu0 0.0
    %961 = vmatpush2.msra.mxu0 0.0
    %962 = vmatprep.subr.mxu0 0.0
    %963 = vmatpush2.msra.mxu0 0.0
    %964 = vmatprep.subr.mxu0 0.0
    %965 = vmatpush2.msra.mxu0 0.0
    %966 = vmatprep.subr.mxu0 0.0
    %967 = vmatpush2.msra.mxu0 0.0
    %968 = vmatprep.subr.mxu0 0.0
    %969 = vmatpush2.msra.mxu0 0.0
    %970 = vmatprep.subr.mxu0 0.0
    %971 = vmatpush2.msra.mxu0 0.0
    %972 = vmatprep.subr.mxu0 0.0
    %973 = vmatpush2.msra.mxu0 0.0
    %974 = vmatprep.subr.mxu0 0.0
    %975 = vmatpush2.msra.mxu0 0.0
    %976 = vmatprep.subr.mxu0 0.0
    %977 = vmatpush2.msra.mxu0 0.0
    %978 = vmatprep.mubr.f32.mxu0 0.0
    %979 = vmatmul.mubr.f32.gmra.mxu0 %v898
    %v980 = vpop.f32.mrf.mxu0
    %v981 = vadd.f32 0.0, %v980
    %v982 = vpop.f32.mrf.mxu0
    %v983 = vadd.f32 0.0, %v982
    %984 = vdwg.mxu0
    %985 = vmatprep.subr.mxu0 %v173
    %986 = vmatpush1.msra.mxu0 %v172
    %987 = vmatprep.subr.mxu0 %v169
    %988 = vmatpush1.msra.mxu0 %v168
    %989 = vmatprep.subr.mxu0 %v165
    %990 = vmatpush1.msra.mxu0 %v164
    %991 = vmatprep.subr.mxu0 %v161
    %992 = vmatpush1.msra.mxu0 %v160
    %993 = vmatprep.subr.mxu0 %v157
    %994 = vmatpush1.msra.mxu0 %v156
    %995 = vmatprep.subr.mxu0 %v153
    %996 = vmatpush1.msra.mxu0 %v152
    %997 = vmatprep.subr.mxu0 %v149
    %998 = vmatpush1.msra.mxu0 %v148
    %999 = vmatprep.subr.mxu0 %v145
    %1000 = vmatpush1.msra.mxu0 %v144
    %1001 = vmatprep.subr.mxu0 %v141
    %1002 = vmatpush1.msra.mxu0 %v140
    %1003 = vmatprep.subr.mxu0 %v137
    %1004 = vmatpush1.msra.mxu0 %v136
    %1005 = vmatprep.subr.mxu0 %v133
    %1006 = vmatpush1.msra.mxu0 %v132
    %1007 = vmatprep.subr.mxu0 %v129
    %1008 = vmatpush1.msra.mxu0 %v128
    %1009 = vmatprep.subr.mxu0 %v125
    %1010 = vmatpush1.msra.mxu0 %v124
    %1011 = vmatprep.subr.mxu0 %v121
    %1012 = vmatpush1.msra.mxu0 %v120
    %1013 = vmatprep.subr.mxu0 %v117
    %1014 = vmatpush1.msra.mxu0 %v116
    %1015 = vmatprep.subr.mxu0 %v113
    %1016 = vmatpush1.msra.mxu0 %v112
    %1017 = vmatprep.subr.mxu0 0.0
    %1018 = vmatpush2.msra.mxu0 0.0
    %1019 = vmatprep.subr.mxu0 0.0
    %1020 = vmatpush2.msra.mxu0 0.0
    %1021 = vmatprep.subr.mxu0 0.0
    %1022 = vmatpush2.msra.mxu0 0.0
    %1023 = vmatprep.subr.mxu0 0.0
    %1024 = vmatpush2.msra.mxu0 0.0
    %1025 = vmatprep.subr.mxu0 0.0
    %1026 = vmatpush2.msra.mxu0 0.0
    %1027 = vmatprep.subr.mxu0 0.0
    %1028 = vmatpush2.msra.mxu0 0.0
    %1029 = vmatprep.subr.mxu0 0.0
    %1030 = vmatpush2.msra.mxu0 0.0
    %1031 = vmatprep.subr.mxu0 0.0
    %1032 = vmatpush2.msra.mxu0 0.0
    %1033 = vmatprep.subr.mxu0 0.0
    %1034 = vmatpush2.msra.mxu0 0.0
    %1035 = vmatprep.subr.mxu0 0.0
    %1036 = vmatpush2.msra.mxu0 0.0
    %1037 = vmatprep.subr.mxu0 0.0
    %1038 = vmatpush2.msra.mxu0 0.0
    %1039 = vmatprep.subr.mxu0 0.0
    %1040 = vmatpush2.msra.mxu0 0.0
    %1041 = vmatprep.subr.mxu0 0.0
    %1042 = vmatpush2.msra.mxu0 0.0
    %1043 = vmatprep.subr.mxu0 0.0
    %1044 = vmatpush2.msra.mxu0 0.0
    %1045 = vmatprep.subr.mxu0 0.0
    %1046 = vmatpush2.msra.mxu0 0.0
    %1047 = vmatprep.subr.mxu0 0.0
    %1048 = vmatpush2.msra.mxu0 0.0
    %1049 = vmatprep.mubr.f32.mxu0 0.0
    %1050 = vmatmul.mubr.f32.gmra.mxu0 %v898
    %v1051 = vpop.f32.mrf.mxu0
    %v1052 = vadd.f32 0.0, %v1051
    %v1053 = vpop.f32.mrf.mxu0
    %v1054 = vadd.f32 0.0, %v1053
    %1055 = vdwg.mxu0
    %v1056 = vadd.f32 %v910, %v981
    %v1057 = vadd.f32 %v911, %v983
    %v1058 = vadd.f32 %v912, %v1052
    %v1059 = vadd.f32 %v913, %v1054
    %v1060 = vxor.u32 %v1056, 2147483648
    %v1061 = vxor.u32 %v1057, 2147483648
    %v1062 = vxor.u32 %v1058, 2147483648
    %v1063 = vmul.f32 %v1060, 1.442695
    %v1064 = vpow.pop %v1063
    %v1065 = vmul.f32 %v1061, 1.442695
    %v1066 = vpow.pop %v1065
    %v1067 = vmul.f32 %v1062, 1.442695
    %v1068 = vpow.pop %v1067
    %v1069 = vadd.f32 %v1064, 1.0
    %v1070 = vadd.f32 %v1066, 1.0
    %v1071 = vadd.f32 %v1068, 1.0
    %v1072 = vrcp.pop %v1069
    %v1073 = vmul.f32 1.0, %v1072
    %v1074 = vrcp.pop %v1070
    %v1075 = vmul.f32 1.0, %v1074
    %v1076 = vrcp.pop %v1071
    %v1077 = vmul.f32 1.0, %v1076
    %v1078 = vtanh.pop %v1059
    %v1079 = vmul.f32 %v1075, %v896
    %v1080 = vmul.f32 %v1073, %v1078
    %v1081 = vadd.f32 %v1079, %v1080
    %v1082 = vtanh.pop %v1081
    %v1083 = vmul.f32 %v1077, %v1082
    %s1084 = scalar_lea.vmem %s0, 40
    %v1085 = vld [vmem:[%s1084] sm:$0xff]
    %1087 = vset.pattern.permute.xlu0 0
    %1088 = vperm.xlu0 %1087, %v1085
    %v1089 = vpop.permute.xlu0 %1088
    %v1091 = vmul.f32 %v1089, %v57
    %v1092 = vmul.f32 %v1089, %v61
    %v1093 = vmul.f32 %v1089, %v65
    %v1094 = vmul.f32 %v1089, %v69
    %v1095 = vadd.f32 %v1091, %v79
    %v1096 = vadd.f32 %v1092, %v83
    %v1097 = vadd.f32 %v1093, %v87
    %v1098 = vadd.f32 %v1094, %v91
    %1099 = vmatprep.subr.mxu0 %v171
    %1100 = vmatpush1.msra.mxu0 %v170
    %1101 = vmatprep.subr.mxu0 %v167
    %1102 = vmatpush1.msra.mxu0 %v166
    %1103 = vmatprep.subr.mxu0 %v163
    %1104 = vmatpush1.msra.mxu0 %v162
    %1105 = vmatprep.subr.mxu0 %v159
    %1106 = vmatpush1.msra.mxu0 %v158
    %1107 = vmatprep.subr.mxu0 %v155
    %1108 = vmatpush1.msra.mxu0 %v154
    %1109 = vmatprep.subr.mxu0 %v151
    %1110 = vmatpush1.msra.mxu0 %v150
    %1111 = vmatprep.subr.mxu0 %v147
    %1112 = vmatpush1.msra.mxu0 %v146
    %1113 = vmatprep.subr.mxu0 %v143
    %1114 = vmatpush1.msra.mxu0 %v142
    %1115 = vmatprep.subr.mxu0 %v139
    %1116 = vmatpush1.msra.mxu0 %v138
    %1117 = vmatprep.subr.mxu0 %v135
    %1118 = vmatpush1.msra.mxu0 %v134
    %1119 = vmatprep.subr.mxu0 %v131
    %1120 = vmatpush1.msra.mxu0 %v130
    %1121 = vmatprep.subr.mxu0 %v127
    %1122 = vmatpush1.msra.mxu0 %v126
    %1123 = vmatprep.subr.mxu0 %v123
    %1124 = vmatpush1.msra.mxu0 %v122
    %1125 = vmatprep.subr.mxu0 %v119
    %1126 = vmatpush1.msra.mxu0 %v118
    %1127 = vmatprep.subr.mxu0 %v115
    %1128 = vmatpush1.msra.mxu0 %v114
    %1129 = vmatprep.subr.mxu0 %v111
    %1130 = vmatpush1.msra.mxu0 %v110
    %1131 = vmatprep.subr.mxu0 0.0
    %1132 = vmatpush2.msra.mxu0 0.0
    %1133 = vmatprep.subr.mxu0 0.0
    %1134 = vmatpush2.msra.mxu0 0.0
    %1135 = vmatprep.subr.mxu0 0.0
    %1136 = vmatpush2.msra.mxu0 0.0
    %1137 = vmatprep.subr.mxu0 0.0
    %1138 = vmatpush2.msra.mxu0 0.0
    %1139 = vmatprep.subr.mxu0 0.0
    %1140 = vmatpush2.msra.mxu0 0.0
    %1141 = vmatprep.subr.mxu0 0.0
    %1142 = vmatpush2.msra.mxu0 0.0
    %1143 = vmatprep.subr.mxu0 0.0
    %1144 = vmatpush2.msra.mxu0 0.0
    %1145 = vmatprep.subr.mxu0 0.0
    %1146 = vmatpush2.msra.mxu0 0.0
    %1147 = vmatprep.subr.mxu0 0.0
    %1148 = vmatpush2.msra.mxu0 0.0
    %1149 = vmatprep.subr.mxu0 0.0
    %1150 = vmatpush2.msra.mxu0 0.0
    %1151 = vmatprep.subr.mxu0 0.0
    %1152 = vmatpush2.msra.mxu0 0.0
    %1153 = vmatprep.subr.mxu0 0.0
    %1154 = vmatpush2.msra.mxu0 0.0
    %1155 = vmatprep.subr.mxu0 0.0
    %1156 = vmatpush2.msra.mxu0 0.0
    %1157 = vmatprep.subr.mxu0 0.0
    %1158 = vmatpush2.msra.mxu0 0.0
    %1159 = vmatprep.subr.mxu0 0.0
    %1160 = vmatpush2.msra.mxu0 0.0
    %1161 = vmatprep.subr.mxu0 0.0
    %1162 = vmatpush2.msra.mxu0 0.0
    %1163 = vmatprep.mubr.f32.mxu0 0.0
    %1164 = vmatmul.mubr.f32.gmra.mxu0 %v1083
    %v1165 = vpop.f32.mrf.mxu0
    %v1166 = vadd.f32 0.0, %v1165
    %v1167 = vpop.f32.mrf.mxu0
    %v1168 = vadd.f32 0.0, %v1167
    %1169 = vdwg.mxu0
    %1170 = vmatprep.subr.mxu0 %v173
    %1171 = vmatpush1.msra.mxu0 %v172
    %1172 = vmatprep.subr.mxu0 %v169
    %1173 = vmatpush1.msra.mxu0 %v168
    %1174 = vmatprep.subr.mxu0 %v165
    %1175 = vmatpush1.msra.mxu0 %v164
    %1176 = vmatprep.subr.mxu0 %v161
    %1177 = vmatpush1.msra.mxu0 %v160
    %1178 = vmatprep.subr.mxu0 %v157
    %1179 = vmatpush1.msra.mxu0 %v156
    %1180 = vmatprep.subr.mxu0 %v153
    %1181 = vmatpush1.msra.mxu0 %v152
    %1182 = vmatprep.subr.mxu0 %v149
    %1183 = vmatpush1.msra.mxu0 %v148
    %1184 = vmatprep.subr.mxu0 %v145
    %1185 = vmatpush1.msra.mxu0 %v144
    %1186 = vmatprep.subr.mxu0 %v141
    %1187 = vmatpush1.msra.mxu0 %v140
    %1188 = vmatprep.subr.mxu0 %v137
    %1189 = vmatpush1.msra.mxu0 %v136
    %1190 = vmatprep.subr.mxu0 %v133
    %1191 = vmatpush1.msra.mxu0 %v132
    %1192 = vmatprep.subr.mxu0 %v129
    %1193 = vmatpush1.msra.mxu0 %v128
    %1194 = vmatprep.subr.mxu0 %v125
    %1195 = vmatpush1.msra.mxu0 %v124
    %1196 = vmatprep.subr.mxu0 %v121
    %1197 = vmatpush1.msra.mxu0 %v120
    %1198 = vmatprep.subr.mxu0 %v117
    %1199 = vmatpush1.msra.mxu0 %v116
    %1200 = vmatprep.subr.mxu0 %v113
    %1201 = vmatpush1.msra.mxu0 %v112
    %1202 = vmatprep.subr.mxu0 0.0
    %1203 = vmatpush2.msra.mxu0 0.0
    %1204 = vmatprep.subr.mxu0 0.0
    %1205 = vmatpush2.msra.mxu0 0.0
    %1206 = vmatprep.subr.mxu0 0.0
    %1207 = vmatpush2.msra.mxu0 0.0
    %1208 = vmatprep.subr.mxu0 0.0
    %1209 = vmatpush2.msra.mxu0 0.0
    %1210 = vmatprep.subr.mxu0 0.0
    %1211 = vmatpush2.msra.mxu0 0.0
    %1212 = vmatprep.subr.mxu0 0.0
    %1213 = vmatpush2.msra.mxu0 0.0
    %1214 = vmatprep.subr.mxu0 0.0
    %1215 = vmatpush2.msra.mxu0 0.0
    %1216 = vmatprep.subr.mxu0 0.0
    %1217 = vmatpush2.msra.mxu0 0.0
    %1218 = vmatprep.subr.mxu0 0.0
    %1219 = vmatpush2.msra.mxu0 0.0
    %1220 = vmatprep.subr.mxu0 0.0
    %1221 = vmatpush2.msra.mxu0 0.0
    %1222 = vmatprep.subr.mxu0 0.0
    %1223 = vmatpush2.msra.mxu0 0.0
    %1224 = vmatprep.subr.mxu0 0.0
    %1225 = vmatpush2.msra.mxu0 0.0
    %1226 = vmatprep.subr.mxu0 0.0
    %1227 = vmatpush2.msra.mxu0 0.0
    %1228 = vmatprep.subr.mxu0 0.0
    %1229 = vmatpush2.msra.mxu0 0.0
    %1230 = vmatprep.subr.mxu0 0.0
    %1231 = vmatpush2.msra.mxu0 0.0
    %1232 = vmatprep.subr.mxu0 0.0
    %1233 = vmatpush2.msra.mxu0 0.0
    %1234 = vmatprep.mubr.f32.mxu0 0.0
    %1235 = vmatmul.mubr.f32.gmra.mxu0 %v1083
    %v1236 = vpop.f32.mrf.mxu0
    %v1237 = vadd.f32 0.0, %v1236
    %v1238 = vpop.f32.mrf.mxu0
    %v1239 = vadd.f32 0.0, %v1238
    %1240 = vdwg.mxu0
    %v1241 = vadd.f32 %v1095, %v1166
    %v1242 = vadd.f32 %v1096, %v1168
    %v1243 = vadd.f32 %v1097, %v1237
    %v1244 = vadd.f32 %v1098, %v1239
    %v1245 = vxor.u32 %v1241, 2147483648
    %v1246 = vxor.u32 %v1242, 2147483648
    %v1247 = vxor.u32 %v1243, 2147483648
    %v1248 = vmul.f32 %v1245, 1.442695
    %v1249 = vpow.pop %v1248
    %v1250 = vmul.f32 %v1246, 1.442695
    %v1251 = vpow.pop %v1250
    %v1252 = vmul.f32 %v1247, 1.442695
    %v1253 = vpow.pop %v1252
    %v1254 = vadd.f32 %v1249, 1.0
    %v1255 = vadd.f32 %v1251, 1.0
    %v1256 = vadd.f32 %v1253, 1.0
    %v1257 = vrcp.pop %v1254
    %v1258 = vmul.f32 1.0, %v1257
    %v1259 = vrcp.pop %v1255
    %v1260 = vmul.f32 1.0, %v1259
    %v1261 = vrcp.pop %v1256
    %v1262 = vmul.f32 1.0, %v1261
    %v1263 = vtanh.pop %v1244
    %v1264 = vmul.f32 %v1260, %v1081
    %v1265 = vmul.f32 %v1258, %v1263
    %v1266 = vadd.f32 %v1264, %v1265
    %v1267 = vtanh.pop %v1266
    %v1268 = vmul.f32 %v1262, %v1267
    %s1269 = scalar_lea.vmem %s0, 48
    %v1270 = vld [vmem:[%s1269] sm:$0xff]
    %1272 = vset.pattern.permute.xlu0 0
    %1273 = vperm.xlu0 %1272, %v1270
    %v1274 = vpop.permute.xlu0 %1273
    %v1276 = vmul.f32 %v1274, %v57
    %v1277 = vmul.f32 %v1274, %v61
    %v1278 = vmul.f32 %v1274, %v65
    %v1279 = vmul.f32 %v1274, %v69
    %v1280 = vadd.f32 %v1276, %v79
    %v1281 = vadd.f32 %v1277, %v83
    %v1282 = vadd.f32 %v1278, %v87
    %v1283 = vadd.f32 %v1279, %v91
    %1284 = vmatprep.subr.mxu0 %v171
    %1285 = vmatpush1.msra.mxu0 %v170
    %1286 = vmatprep.subr.mxu0 %v167
    %1287 = vmatpush1.msra.mxu0 %v166
    %1288 = vmatprep.subr.mxu0 %v163
    %1289 = vmatpush1.msra.mxu0 %v162
    %1290 = vmatprep.subr.mxu0 %v159
    %1291 = vmatpush1.msra.mxu0 %v158
    %1292 = vmatprep.subr.mxu0 %v155
    %1293 = vmatpush1.msra.mxu0 %v154
    %1294 = vmatprep.subr.mxu0 %v151
    %1295 = vmatpush1.msra.mxu0 %v150
    %1296 = vmatprep.subr.mxu0 %v147
    %1297 = vmatpush1.msra.mxu0 %v146
    %1298 = vmatprep.subr.mxu0 %v143
    %1299 = vmatpush1.msra.mxu0 %v142
    %1300 = vmatprep.subr.mxu0 %v139
    %1301 = vmatpush1.msra.mxu0 %v138
    %1302 = vmatprep.subr.mxu0 %v135
    %1303 = vmatpush1.msra.mxu0 %v134
    %1304 = vmatprep.subr.mxu0 %v131
    %1305 = vmatpush1.msra.mxu0 %v130
    %1306 = vmatprep.subr.mxu0 %v127
    %1307 = vmatpush1.msra.mxu0 %v126
    %1308 = vmatprep.subr.mxu0 %v123
    %1309 = vmatpush1.msra.mxu0 %v122
    %1310 = vmatprep.subr.mxu0 %v119
    %1311 = vmatpush1.msra.mxu0 %v118
    %1312 = vmatprep.subr.mxu0 %v115
    %1313 = vmatpush1.msra.mxu0 %v114
    %1314 = vmatprep.subr.mxu0 %v111
    %1315 = vmatpush1.msra.mxu0 %v110
    %1316 = vmatprep.subr.mxu0 0.0
    %1317 = vmatpush2.msra.mxu0 0.0
    %1318 = vmatprep.subr.mxu0 0.0
    %1319 = vmatpush2.msra.mxu0 0.0
    %1320 = vmatprep.subr.mxu0 0.0
    %1321 = vmatpush2.msra.mxu0 0.0
    %1322 = vmatprep.subr.mxu0 0.0
    %1323 = vmatpush2.msra.mxu0 0.0
    %1324 = vmatprep.subr.mxu0 0.0
    %1325 = vmatpush2.msra.mxu0 0.0
    %1326 = vmatprep.subr.mxu0 0.0
    %1327 = vmatpush2.msra.mxu0 0.0
    %1328 = vmatprep.subr.mxu0 0.0
    %1329 = vmatpush2.msra.mxu0 0.0
    %1330 = vmatprep.subr.mxu0 0.0
    %1331 = vmatpush2.msra.mxu0 0.0
    %1332 = vmatprep.subr.mxu0 0.0
    %1333 = vmatpush2.msra.mxu0 0.0
    %1334 = vmatprep.subr.mxu0 0.0
    %1335 = vmatpush2.msra.mxu0 0.0
    %1336 = vmatprep.subr.mxu0 0.0
    %1337 = vmatpush2.msra.mxu0 0.0
    %1338 = vmatprep.subr.mxu0 0.0
    %1339 = vmatpush2.msra.mxu0 0.0
    %1340 = vmatprep.subr.mxu0 0.0
    %1341 = vmatpush2.msra.mxu0 0.0
    %1342 = vmatprep.subr.mxu0 0.0
    %1343 = vmatpush2.msra.mxu0 0.0
    %1344 = vmatprep.subr.mxu0 0.0
    %1345 = vmatpush2.msra.mxu0 0.0
    %1346 = vmatprep.subr.mxu0 0.0
    %1347 = vmatpush2.msra.mxu0 0.0
    %1348 = vmatprep.mubr.f32.mxu0 0.0
    %1349 = vmatmul.mubr.f32.gmra.mxu0 %v1268
    %v1350 = vpop.f32.mrf.mxu0
    %v1351 = vadd.f32 0.0, %v1350
    %v1352 = vpop.f32.mrf.mxu0
    %v1353 = vadd.f32 0.0, %v1352
    %1354 = vdwg.mxu0
    %1355 = vmatprep.subr.mxu0 %v173
    %1356 = vmatpush1.msra.mxu0 %v172
    %1357 = vmatprep.subr.mxu0 %v169
    %1358 = vmatpush1.msra.mxu0 %v168
    %1359 = vmatprep.subr.mxu0 %v165
    %1360 = vmatpush1.msra.mxu0 %v164
    %1361 = vmatprep.subr.mxu0 %v161
    %1362 = vmatpush1.msra.mxu0 %v160
    %1363 = vmatprep.subr.mxu0 %v157
    %1364 = vmatpush1.msra.mxu0 %v156
    %1365 = vmatprep.subr.mxu0 %v153
    %1366 = vmatpush1.msra.mxu0 %v152
    %1367 = vmatprep.subr.mxu0 %v149
    %1368 = vmatpush1.msra.mxu0 %v148
    %1369 = vmatprep.subr.mxu0 %v145
    %1370 = vmatpush1.msra.mxu0 %v144
    %1371 = vmatprep.subr.mxu0 %v141
    %1372 = vmatpush1.msra.mxu0 %v140
    %1373 = vmatprep.subr.mxu0 %v137
    %1374 = vmatpush1.msra.mxu0 %v136
    %1375 = vmatprep.subr.mxu0 %v133
    %1376 = vmatpush1.msra.mxu0 %v132
    %1377 = vmatprep.subr.mxu0 %v129
    %1378 = vmatpush1.msra.mxu0 %v128
    %1379 = vmatprep.subr.mxu0 %v125
    %1380 = vmatpush1.msra.mxu0 %v124
    %1381 = vmatprep.subr.mxu0 %v121
    %1382 = vmatpush1.msra.mxu0 %v120
    %1383 = vmatprep.subr.mxu0 %v117
    %1384 = vmatpush1.msra.mxu0 %v116
    %1385 = vmatprep.subr.mxu0 %v113
    %1386 = vmatpush1.msra.mxu0 %v112
    %1387 = vmatprep.subr.mxu0 0.0
    %1388 = vmatpush2.msra.mxu0 0.0
    %1389 = vmatprep.subr.mxu0 0.0
    %1390 = vmatpush2.msra.mxu0 0.0
    %1391 = vmatprep.subr.mxu0 0.0
    %1392 = vmatpush2.msra.mxu0 0.0
    %1393 = vmatprep.subr.mxu0 0.0
    %1394 = vmatpush2.msra.mxu0 0.0
    %1395 = vmatprep.subr.mxu0 0.0
    %1396 = vmatpush2.msra.mxu0 0.0
    %1397 = vmatprep.subr.mxu0 0.0
    %1398 = vmatpush2.msra.mxu0 0.0
    %1399 = vmatprep.subr.mxu0 0.0
    %1400 = vmatpush2.msra.mxu0 0.0
    %1401 = vmatprep.subr.mxu0 0.0
    %1402 = vmatpush2.msra.mxu0 0.0
    %1403 = vmatprep.subr.mxu0 0.0
    %1404 = vmatpush2.msra.mxu0 0.0
    %1405 = vmatprep.subr.mxu0 0.0
    %1406 = vmatpush2.msra.mxu0 0.0
    %1407 = vmatprep.subr.mxu0 0.0
    %1408 = vmatpush2.msra.mxu0 0.0
    %1409 = vmatprep.subr.mxu0 0.0
    %1410 = vmatpush2.msra.mxu0 0.0
    %1411 = vmatprep.subr.mxu0 0.0
    %1412 = vmatpush2.msra.mxu0 0.0
    %1413 = vmatprep.subr.mxu0 0.0
    %1414 = vmatpush2.msra.mxu0 0.0
    %1415 = vmatprep.subr.mxu0 0.0
    %1416 = vmatpush2.msra.mxu0 0.0
    %1417 = vmatprep.subr.mxu0 0.0
    %1418 = vmatpush2.msra.mxu0 0.0
    %1419 = vmatprep.mubr.f32.mxu0 0.0
    %1420 = vmatmul.mubr.f32.gmra.mxu0 %v1268
    %v1421 = vpop.f32.mrf.mxu0
    %v1422 = vadd.f32 0.0, %v1421
    %v1423 = vpop.f32.mrf.mxu0
    %v1424 = vadd.f32 0.0, %v1423
    %1425 = vdwg.mxu0
    %v1426 = vadd.f32 %v1280, %v1351
    %v1427 = vadd.f32 %v1281, %v1353
    %v1428 = vadd.f32 %v1282, %v1422
    %v1429 = vadd.f32 %v1283, %v1424
    %v1430 = vxor.u32 %v1426, 2147483648
    %v1431 = vxor.u32 %v1427, 2147483648
    %v1432 = vxor.u32 %v1428, 2147483648
    %v1433 = vmul.f32 %v1430, 1.442695
    %v1434 = vpow.pop %v1433
    %v1435 = vmul.f32 %v1431, 1.442695
    %v1436 = vpow.pop %v1435
    %v1437 = vmul.f32 %v1432, 1.442695
    %v1438 = vpow.pop %v1437
    %v1439 = vadd.f32 %v1434, 1.0
    %v1440 = vadd.f32 %v1436, 1.0
    %v1441 = vadd.f32 %v1438, 1.0
    %v1442 = vrcp.pop %v1439
    %v1443 = vmul.f32 1.0, %v1442
    %v1444 = vrcp.pop %v1440
    %v1445 = vmul.f32 1.0, %v1444
    %v1446 = vrcp.pop %v1441
    %v1447 = vmul.f32 1.0, %v1446
    %v1448 = vtanh.pop %v1429
    %v1449 = vmul.f32 %v1445, %v1266
    %v1450 = vmul.f32 %v1443, %v1448
    %v1451 = vadd.f32 %v1449, %v1450
    %v1452 = vtanh.pop %v1451
    %v1453 = vmul.f32 %v1447, %v1452
    %s1454 = scalar_lea.vmem %s0, 56
    %v1455 = vld [vmem:[%s1454] sm:$0xff]
    %1457 = vset.pattern.permute.xlu0 0
    %1458 = vperm.xlu0 %1457, %v1455
    %v1459 = vpop.permute.xlu0 %1458
    %v1461 = vmul.f32 %v1459, %v57
    %v1462 = vmul.f32 %v1459, %v61
    %v1463 = vmul.f32 %v1459, %v65
    %v1464 = vmul.f32 %v1459, %v69
    %v1465 = vadd.f32 %v1461, %v79
    %v1466 = vadd.f32 %v1462, %v83
    %v1467 = vadd.f32 %v1463, %v87
    %v1468 = vadd.f32 %v1464, %v91
    %1469 = vmatprep.subr.mxu0 %v171
    %1470 = vmatpush1.msra.mxu0 %v170
    %1471 = vmatprep.subr.mxu0 %v167
    %1472 = vmatpush1.msra.mxu0 %v166
    %1473 = vmatprep.subr.mxu0 %v163
    %1474 = vmatpush1.msra.mxu0 %v162
    %1475 = vmatprep.subr.mxu0 %v159
    %1476 = vmatpush1.msra.mxu0 %v158
    %1477 = vmatprep.subr.mxu0 %v155
    %1478 = vmatpush1.msra.mxu0 %v154
    %1479 = vmatprep.subr.mxu0 %v151
    %1480 = vmatpush1.msra.mxu0 %v150
    %1481 = vmatprep.subr.mxu0 %v147
    %1482 = vmatpush1.msra.mxu0 %v146
    %1483 = vmatprep.subr.mxu0 %v143
    %1484 = vmatpush1.msra.mxu0 %v142
    %1485 = vmatprep.subr.mxu0 %v139
    %1486 = vmatpush1.msra.mxu0 %v138
    %1487 = vmatprep.subr.mxu0 %v135
    %1488 = vmatpush1.msra.mxu0 %v134
    %1489 = vmatprep.subr.mxu0 %v131
    %1490 = vmatpush1.msra.mxu0 %v130
    %1491 = vmatprep.subr.mxu0 %v127
    %1492 = vmatpush1.msra.mxu0 %v126
    %1493 = vmatprep.subr.mxu0 %v123
    %1494 = vmatpush1.msra.mxu0 %v122
    %1495 = vmatprep.subr.mxu0 %v119
    %1496 = vmatpush1.msra.mxu0 %v118
    %1497 = vmatprep.subr.mxu0 %v115
    %1498 = vmatpush1.msra.mxu0 %v114
    %1499 = vmatprep.subr.mxu0 %v111
    %1500 = vmatpush1.msra.mxu0 %v110
    %1501 = vmatprep.subr.mxu0 0.0
    %1502 = vmatpush2.msra.mxu0 0.0
    %1503 = vmatprep.subr.mxu0 0.0
    %1504 = vmatpush2.msra.mxu0 0.0
    %1505 = vmatprep.subr.mxu0 0.0
    %1506 = vmatpush2.msra.mxu0 0.0
    %1507 = vmatprep.subr.mxu0 0.0
    %1508 = vmatpush2.msra.mxu0 0.0
    %1509 = vmatprep.subr.mxu0 0.0
    %1510 = vmatpush2.msra.mxu0 0.0
    %1511 = vmatprep.subr.mxu0 0.0
    %1512 = vmatpush2.msra.mxu0 0.0
    %1513 = vmatprep.subr.mxu0 0.0
    %1514 = vmatpush2.msra.mxu0 0.0
    %1515 = vmatprep.subr.mxu0 0.0
    %1516 = vmatpush2.msra.mxu0 0.0
    %1517 = vmatprep.subr.mxu0 0.0
    %1518 = vmatpush2.msra.mxu0 0.0
    %1519 = vmatprep.subr.mxu0 0.0
    %1520 = vmatpush2.msra.mxu0 0.0
    %1521 = vmatprep.subr.mxu0 0.0
    %1522 = vmatpush2.msra.mxu0 0.0
    %1523 = vmatprep.subr.mxu0 0.0
    %1524 = vmatpush2.msra.mxu0 0.0
    %1525 = vmatprep.subr.mxu0 0.0
    %1526 = vmatpush2.msra.mxu0 0.0
    %1527 = vmatprep.subr.mxu0 0.0
    %1528 = vmatpush2.msra.mxu0 0.0
    %1529 = vmatprep.subr.mxu0 0.0
    %1530 = vmatpush2.msra.mxu0 0.0
    %1531 = vmatprep.subr.mxu0 0.0
    %1532 = vmatpush2.msra.mxu0 0.0
    %1533 = vmatprep.mubr.f32.mxu0 0.0
    %1534 = vmatmul.mubr.f32.gmra.mxu0 %v1453
    %v1535 = vpop.f32.mrf.mxu0
    %v1536 = vadd.f32 0.0, %v1535
    %v1537 = vpop.f32.mrf.mxu0
    %v1538 = vadd.f32 0.0, %v1537
    %1539 = vdwg.mxu0
    %1540 = vmatprep.subr.mxu0 %v173
    %1541 = vmatpush1.msra.mxu0 %v172
    %1542 = vmatprep.subr.mxu0 %v169
    %1543 = vmatpush1.msra.mxu0 %v168
    %1544 = vmatprep.subr.mxu0 %v165
    %1545 = vmatpush1.msra.mxu0 %v164
    %1546 = vmatprep.subr.mxu0 %v161
    %1547 = vmatpush1.msra.mxu0 %v160
    %1548 = vmatprep.subr.mxu0 %v157
    %1549 = vmatpush1.msra.mxu0 %v156
    %1550 = vmatprep.subr.mxu0 %v153
    %1551 = vmatpush1.msra.mxu0 %v152
    %1552 = vmatprep.subr.mxu0 %v149
    %1553 = vmatpush1.msra.mxu0 %v148
    %1554 = vmatprep.subr.mxu0 %v145
    %1555 = vmatpush1.msra.mxu0 %v144
    %1556 = vmatprep.subr.mxu0 %v141
    %1557 = vmatpush1.msra.mxu0 %v140
    %1558 = vmatprep.subr.mxu0 %v137
    %1559 = vmatpush1.msra.mxu0 %v136
    %1560 = vmatprep.subr.mxu0 %v133
    %1561 = vmatpush1.msra.mxu0 %v132
    %1562 = vmatprep.subr.mxu0 %v129
    %1563 = vmatpush1.msra.mxu0 %v128
    %1564 = vmatprep.subr.mxu0 %v125
    %1565 = vmatpush1.msra.mxu0 %v124
    %1566 = vmatprep.subr.mxu0 %v121
    %1567 = vmatpush1.msra.mxu0 %v120
    %1568 = vmatprep.subr.mxu0 %v117
    %1569 = vmatpush1.msra.mxu0 %v116
    %1570 = vmatprep.subr.mxu0 %v113
    %1571 = vmatpush1.msra.mxu0 %v112
    %1572 = vmatprep.subr.mxu0 0.0
    %1573 = vmatpush2.msra.mxu0 0.0
    %1574 = vmatprep.subr.mxu0 0.0
    %1575 = vmatpush2.msra.mxu0 0.0
    %1576 = vmatprep.subr.mxu0 0.0
    %1577 = vmatpush2.msra.mxu0 0.0
    %1578 = vmatprep.subr.mxu0 0.0
    %1579 = vmatpush2.msra.mxu0 0.0
    %1580 = vmatprep.subr.mxu0 0.0
    %1581 = vmatpush2.msra.mxu0 0.0
    %1582 = vmatprep.subr.mxu0 0.0
    %1583 = vmatpush2.msra.mxu0 0.0
    %1584 = vmatprep.subr.mxu0 0.0
    %1585 = vmatpush2.msra.mxu0 0.0
    %1586 = vmatprep.subr.mxu0 0.0
    %1587 = vmatpush2.msra.mxu0 0.0
    %1588 = vmatprep.subr.mxu0 0.0
    %1589 = vmatpush2.msra.mxu0 0.0
    %1590 = vmatprep.subr.mxu0 0.0
    %1591 = vmatpush2.msra.mxu0 0.0
    %1592 = vmatprep.subr.mxu0 0.0
    %1593 = vmatpush2.msra.mxu0 0.0
    %1594 = vmatprep.subr.mxu0 0.0
    %1595 = vmatpush2.msra.mxu0 0.0
    %1596 = vmatprep.subr.mxu0 0.0
    %1597 = vmatpush2.msra.mxu0 0.0
    %1598 = vmatprep.subr.mxu0 0.0
    %1599 = vmatpush2.msra.mxu0 0.0
    %1600 = vmatprep.subr.mxu0 0.0
    %1601 = vmatpush2.msra.mxu0 0.0
    %1602 = vmatprep.subr.mxu0 0.0
    %1603 = vmatpush2.msra.mxu0 0.0
    %1604 = vmatprep.mubr.f32.mxu0 0.0
    %1605 = vmatmul.mubr.f32.gmra.mxu0 %v1453
    %v1606 = vpop.f32.mrf.mxu0
    %v1607 = vadd.f32 0.0, %v1606
    %v1608 = vpop.f32.mrf.mxu0
    %v1609 = vadd.f32 0.0, %v1608
    %1610 = vdwg.mxu0
    %v1611 = vadd.f32 %v1465, %v1536
    %v1612 = vadd.f32 %v1466, %v1538
    %v1613 = vadd.f32 %v1467, %v1607
    %v1614 = vadd.f32 %v1468, %v1609
    %v1615 = vxor.u32 %v1611, 2147483648
    %v1616 = vxor.u32 %v1612, 2147483648
    %v1617 = vxor.u32 %v1613, 2147483648
    %v1618 = vmul.f32 %v1615, 1.442695
    %v1619 = vpow.pop %v1618
    %v1620 = vmul.f32 %v1616, 1.442695
    %v1621 = vpow.pop %v1620
    %v1622 = vmul.f32 %v1617, 1.442695
    %v1623 = vpow.pop %v1622
    %v1624 = vadd.f32 %v1619, 1.0
    %v1625 = vadd.f32 %v1621, 1.0
    %v1626 = vadd.f32 %v1623, 1.0
    %v1627 = vrcp.pop %v1624
    %v1628 = vmul.f32 1.0, %v1627
    %v1629 = vrcp.pop %v1625
    %v1630 = vmul.f32 1.0, %v1629
    %v1631 = vrcp.pop %v1626
    %v1632 = vmul.f32 1.0, %v1631
    %v1633 = vtanh.pop %v1614
    %v1634 = vmul.f32 %v1630, %v1451
    %v1635 = vmul.f32 %v1628, %v1633
    %v1636 = vadd.f32 %v1634, %v1635
    %v1637 = vtanh.pop %v1636
    %v1638 = vmul.f32 %v1632, %v1637
    %v1639 = vld [vmem:[#allocation5] sm:$0xff]
    %v1640 = vld [vmem:[#allocation5 + $0x8] sm:$0xff]
    %v1641 = vld [vmem:[#allocation5 + $0x10] sm:$0xff]
    %v1642 = vld [vmem:[#allocation5 + $0x18] sm:$0xff]
    %v1643 = vld [vmem:[#allocation5 + $0x20] sm:$0xff]
    %v1644 = vld [vmem:[#allocation5 + $0x28] sm:$0xff]
    %v1645 = vld [vmem:[#allocation5 + $0x30] sm:$0xff]
    %v1646 = vld [vmem:[#allocation5 + $0x38] sm:$0xff]
    %v1647 = vld [vmem:[#allocation5 + $0x40] sm:$0xff]
    %v1648 = vld [vmem:[#allocation5 + $0x48] sm:$0xff]
    %v1649 = vld [vmem:[#allocation5 + $0x50] sm:$0xff]
    %v1650 = vld [vmem:[#allocation5 + $0x58] sm:$0xff]
    %v1651 = vld [vmem:[#allocation5 + $0x60] sm:$0xff]
    %v1652 = vld [vmem:[#allocation5 + $0x68] sm:$0xff]
    %v1653 = vld [vmem:[#allocation5 + $0x70] sm:$0xff]
    %v1654 = vld [vmem:[#allocation5 + $0x78] sm:$0xff]
    %v1655 = vld [vmem:[%s5] sm:$0x1]
    %v1657 = vlaneseq
    %v1658 = vshrl.u32 %v1657, 7
    %v1659 = vsub.s32 0, %v1658
    %v1660 = vrot.slane %v1655, %v1659
    %1662 = vmatprep.subr.mxu0 0.0
    %1663 = vmatpush1.msra.mxu0 %v1654
    %1664 = vmatprep.subr.mxu0 0.0
    %1665 = vmatpush1.msra.mxu0 %v1653
    %1666 = vmatprep.subr.mxu0 0.0
    %1667 = vmatpush1.msra.mxu0 %v1652
    %1668 = vmatprep.subr.mxu0 0.0
    %1669 = vmatpush1.msra.mxu0 %v1651
    %1670 = vmatprep.subr.mxu0 0.0
    %1671 = vmatpush1.msra.mxu0 %v1650
    %1672 = vmatprep.subr.mxu0 0.0
    %1673 = vmatpush1.msra.mxu0 %v1649
    %1674 = vmatprep.subr.mxu0 0.0
    %1675 = vmatpush1.msra.mxu0 %v1648
    %1676 = vmatprep.subr.mxu0 0.0
    %1677 = vmatpush1.msra.mxu0 %v1647
    %1678 = vmatprep.subr.mxu0 0.0
    %1679 = vmatpush1.msra.mxu0 %v1646
    %1680 = vmatprep.subr.mxu0 0.0
    %1681 = vmatpush1.msra.mxu0 %v1645
    %1682 = vmatprep.subr.mxu0 0.0
    %1683 = vmatpush1.msra.mxu0 %v1644
    %1684 = vmatprep.subr.mxu0 0.0
    %1685 = vmatpush1.msra.mxu0 %v1643
    %1686 = vmatprep.subr.mxu0 0.0
    %1687 = vmatpush1.msra.mxu0 %v1642
    %1688 = vmatprep.subr.mxu0 0.0
    %1689 = vmatpush1.msra.mxu0 %v1641
    %1690 = vmatprep.subr.mxu0 0.0
    %1691 = vmatpush1.msra.mxu0 %v1640
    %1692 = vmatprep.subr.mxu0 0.0
    %1693 = vmatpush1.msra.mxu0 %v1639
    %1694 = vmatprep.subr.mxu0 0.0
    %1695 = vmatpush2.msra.mxu0 0.0
    %1696 = vmatprep.subr.mxu0 0.0
    %1697 = vmatpush2.msra.mxu0 0.0
    %1698 = vmatprep.subr.mxu0 0.0
    %1699 = vmatpush2.msra.mxu0 0.0
    %1700 = vmatprep.subr.mxu0 0.0
    %1701 = vmatpush2.msra.mxu0 0.0
    %1702 = vmatprep.subr.mxu0 0.0
    %1703 = vmatpush2.msra.mxu0 0.0
    %1704 = vmatprep.subr.mxu0 0.0
    %1705 = vmatpush2.msra.mxu0 0.0
    %1706 = vmatprep.subr.mxu0 0.0
    %1707 = vmatpush2.msra.mxu0 0.0
    %1708 = vmatprep.subr.mxu0 0.0
    %1709 = vmatpush2.msra.mxu0 0.0
    %1710 = vmatprep.subr.mxu0 0.0
    %1711 = vmatpush2.msra.mxu0 0.0
    %1712 = vmatprep.subr.mxu0 0.0
    %1713 = vmatpush2.msra.mxu0 0.0
    %1714 = vmatprep.subr.mxu0 0.0
    %1715 = vmatpush2.msra.mxu0 0.0
    %1716 = vmatprep.subr.mxu0 0.0
    %1717 = vmatpush2.msra.mxu0 0.0
    %1718 = vmatprep.subr.mxu0 0.0
    %1719 = vmatpush2.msra.mxu0 0.0
    %1720 = vmatprep.subr.mxu0 0.0
    %1721 = vmatpush2.msra.mxu0 0.0
    %1722 = vmatprep.subr.mxu0 0.0
    %1723 = vmatpush2.msra.mxu0 0.0
    %1724 = vmatprep.subr.mxu0 0.0
    %1725 = vmatpush2.msra.mxu0 0.0
    %1726 = vmatprep.mubr.f32.mxu0 0.0
    %1727 = vmatmul.mubr.f32.gmra.mxu0 %v1638
    %v1728 = vpop.f32.mrf.mxu0
    %v1729 = vadd.f32 %v1660, %v1728
    %v1730 = vpop.f32.mrf.mxu0
    %1731 = vdwg.mxu0
    %1732 = vst [vmem:[#allocation7] sm:$0xff] %v1729
    // Predicated region
    $region34: #{tpu_custom_call.1} parent=1 // pred_check
      _
    $region35: #{tpu_custom_call.1} parent=1 // pred_check_branch
      %1734 = sbr.rel (0) target = $region37
    $region36: #{tpu_custom_call.1} parent=1 // pred_region
      %s1736 = ssub.s32 128, 128
      %1737 = vsyncadd [#allocation4], %s1736
      %s1739 = sshll.u32 [#allocation7], 4
      %s1740 = int_to_ptr.vmem [resolvable:$true] %s1739
      %1742 = dma.vmem_to_hbm [thread:$0]  %s1740, 128, %s6, [#allocation4]
    $region37: #{tpu_custom_call.1} parent=1 // pred_fallthru
      _
    // Predicated region
    $region38: #{tpu_custom_call.1} parent=1 // pred_check
      _
    $region39: #{tpu_custom_call.1} parent=1 // pred_check_branch
      %1744 = sbr.rel (0) target = $region41
    $region40: #{tpu_custom_call.1} parent=1 // pred_region
      %1745 = dma.done [#allocation4], 128
    $region41: #{tpu_custom_call.1} parent=1 // pred_fallthru
      _
    %1746 = vsyncpa [#allocation3], 1
    %1747 = vsyncpa [#allocation6], 1
    %1748 = vsyncpa [#allocation4], 1

</llo_original>
